<compile_context>
chip_gen: v7x
topology: tpu7x:2x2x1
jax: 0.10.0
libtpu: 0.0.40
codegen_flags: <defaults>
</compile_context>

<pallas_src>
import functools

import jax
import jax.numpy as jnp
import numpy as np
from jax.experimental import pallas as pl
from jax.experimental.pallas import tpu as pltpu


def _pick_channel_tile(C, H, W, budget_bytes=8 * 1024 * 1024):
    """Largest divisor of C whose (double-buffered) input block fits the budget."""
    per_ch = H * W * 4  # f32 compute
    max_tc = max(1, budget_bytes // (2 * per_ch))
    best = 1
    for tc in range(1, C + 1):
        if C % tc == 0 and tc <= max_tc:
            best = tc
    return best
    # TODO(synk): for very large H*W (single-channel block > VMEM budget) add
    # spatial tiling with a (ks//2)-row halo; not needed for typical UNet maps.


# ---------------------------------------------------------------------------
# Fused kernel: channel max/sum streaming + 7x7 conv (2->1, no bias) + sigmoid.
#   grid = (N, C // TC);  channel axis is the reduction ("arbitrary") axis.
# ---------------------------------------------------------------------------
def _spatial_attn_kernel(x_ref, w_ref, o_ref, mx_ref, sm_ref, pp_ref,
                         *, ks, H, W):
    # x_ref : [1, TC, H, W]              streamed input block (VMEM)
    # w_ref : [2*ks*ks]                  conv weights, SMEM scalars
    #                                    (avg-channel weights pre-scaled by 1/C)
    # o_ref : [1, 1, H, W]               output block
    # mx_ref: [H, W] f32                 running channel max      (scratch)
    # sm_ref: [H, W] f32                 running channel sum      (scratch)
    # pp_ref: [2, H+2p, W+2p] f32        zero-padded pooled maps  (scratch)
    c_step = pl.program_id(1)
    last = pl.num_programs(1) - 1
    pad = ks // 2

    x = x_ref[0].astype(jnp.float32)          # [TC, H, W]
    blk_max = jnp.max(x, axis=0)              # [H, W]
    blk_sum = jnp.sum(x, axis=0)              # [H, W]

    @pl.when(c_step == 0)
    def _():
        mx_ref[...] = blk_max
        sm_ref[...] = blk_sum

    @pl.when(c_step > 0)
    def _():
        mx_ref[...] = jnp.maximum(mx_ref[...], blk_max)
        sm_ref[...] = sm_ref[...] + blk_sum

    @pl.when(c_step == last)
    def _():
        # Zero-padded pooled maps (== Conv2d padding=ks//2 semantics).
        pp_ref[...] = jnp.zeros_like(pp_ref)
        pp_ref[0, pad:pad + H, pad:pad + W] = mx_ref[...]
        pp_ref[1, pad:pad + H, pad:pad + W] = sm_ref[...]  # 1/C folded into w

        acc = jnp.zeros((H, W), jnp.float32)
        for ci in range(2):
            for kh in range(ks):
                for kw in range(ks):
                    wv = w_ref[ci * ks * ks + kh * ks + kw]   # SMEM scalar
                    acc = acc + wv * pp_ref[ci, kh:kh + H, kw:kw + W]
        o_ref[0, 0, :, :] = jax.nn.sigmoid(acc).astype(o_ref.dtype)


# ---------------------------------------------------------------------------
# Wrapper (PyTorch-style NCHW in / NCHW out).
# ---------------------------------------------------------------------------
def spatial_attention(x, weight):
    """x: [N, C, H, W], weight: [1, 2, ks, ks] (OIHW, bias=False).

    Returns sigmoid(conv2d(cat([max_c(x), mean_c(x)]), weight)) of shape
    [N, 1, H, W], matching SpatialAttentionModule.forward.
    """
    N, C, H, W = x.shape
    ks = int(weight.shape[-1])
    pad = ks // 2

    # Fold the mean normalisation (1/C) into the avg-channel conv weights.
    w = weight.astype(jnp.float32)
    w = w.at[0, 1].multiply(1.0 / C)
    w_flat = w.reshape(2 * ks * ks)            # ordering: [c_in, kh, kw]

    tc = _pick_channel_tile(C, H, W)
    nc = C // tc

    out = pl.pallas_call(
        functools.partial(_spatial_attn_kernel, ks=ks, H=H, W=W),
        out_shape=jax.ShapeDtypeStruct((N, 1, H, W), x.dtype),
        grid=(N, nc),
        in_specs=[
            pl.BlockSpec((1, tc, H, W), lambda n, c: (n, c, 0, 0)),
            pl.BlockSpec(memory_space=pltpu.MemorySpace.SMEM),
        ],
        out_specs=pl.BlockSpec((1, 1, H, W), lambda n, c: (n, 0, 0, 0)),
        scratch_shapes=[
            pltpu.VMEM((H, W), jnp.float32),                      # channel max
            pltpu.VMEM((H, W), jnp.float32),                      # channel sum
            pltpu.VMEM((2, H + 2 * pad, W + 2 * pad), jnp.float32),  # padded pools
        ],
        compiler_params=pltpu.CompilerParams(
            dimension_semantics=("parallel", "arbitrary")),
    )(x, w_flat)

    return out


# ---------------------------------------------------------------------------
# Pure-JAX reference (matches the PyTorch forward).
# ---------------------------------------------------------------------------
def _reference(x, weight):
    mx = jnp.max(x, axis=1, keepdims=True)
    av = jnp.mean(x, axis=1, keepdims=True)
    cat = jnp.concatenate([mx, av], axis=1)
    pad = weight.shape[-1] // 2
    conv = jax.lax.conv_general_dilated(
        cat, weight, window_strides=(1, 1), padding=((pad, pad), (pad, pad)),
        dimension_numbers=("NCHW", "OIHW", "NCHW"))
    return jax.nn.sigmoid(conv)


if __name__ == "__main__":
    N, C, H, W = 2, 4, 16, 16
    KS = 7

    key = jax.random.PRNGKey(0)
    kx, kw = jax.random.split(key, 2)

    x = jax.random.normal(kx, (N, C, H, W), dtype=jnp.float32)

    # nn.Conv2d(2, 1, 7, padding=3, bias=False) — default-style uniform init.
    fan_in = 2 * KS * KS
    bound = 1.0 / np.sqrt(fan_in)
    weight = jax.random.uniform(kw, (1, 2, KS, KS), dtype=jnp.float32,
                                minval=-bound, maxval=bound)

    out = jax.block_until_ready(spatial_attention(x, weight))
    ref = jax.block_until_ready(_reference(x, weight))

    np.testing.assert_allclose(np.asarray(out), np.asarray(ref),
                               atol=1e-4, rtol=1e-4)
    print("KERNEL_OK")
</pallas_src>

<mosaic_0001>
module attributes {stable_mosaic.version = 11 : i64} {
  func.func @_spatial_attn_kernel(%arg0: i32, %arg1: i32, %arg2: memref<1x4x16x16xf32, #tpu.memory_space<vmem>>, %arg3: memref<98xf32, #tpu.memory_space<smem>>, %arg4: memref<1x1x16x16xf32, #tpu.memory_space<vmem>>, %arg5: memref<16x16xf32, #tpu.memory_space<vmem>>, %arg6: memref<16x16xf32, #tpu.memory_space<vmem>>, %arg7: memref<2x22x22xf32, #tpu.memory_space<vmem>>) attributes {dimension_semantics = [#tpu.dimension_semantics<parallel>, #tpu.dimension_semantics<arbitrary>], iteration_bounds = array<i64: 2, 1>, scalar_prefetch = 0 : i64, scratch_operands = 3 : i64, tpu.core_type = #tpu.core_type<tc>, window_params = [{transform_indices = @transform_0, window_bounds = array<i64: 1, 4, 16, 16>}, {transform_indices = @transform_1, window_bounds = array<i64: 98>}, {transform_indices = @transform_2, window_bounds = array<i64: 1, 1, 16, 16>}]} {
    %c0 = arith.constant 0 : index
    %c0_0 = arith.constant 0 : index
    %c0_1 = arith.constant 0 : index
    %c0_2 = arith.constant 0 : index
    %0 = vector.load %arg2[%c0, %c0_0, %c0_1, %c0_2] : memref<1x4x16x16xf32, #tpu.memory_space<vmem>>, vector<1x4x16x16xf32>
    %1 = vector.shape_cast %0 : vector<1x4x16x16xf32> to vector<4x16x16xf32>
    %cst = arith.constant dense<0xFF800000> : vector<16x16xf32>
    %2 = vector.multi_reduction <maximumf>, %1, %cst [0] : vector<4x16x16xf32> to vector<16x16xf32>
    %cst_3 = arith.constant dense<0.000000e+00> : vector<16x16xf32>
    %3 = vector.multi_reduction <add>, %1, %cst_3 [0] : vector<4x16x16xf32> to vector<16x16xf32>
    %c0_i32 = arith.constant 0 : i32
    %4 = arith.cmpi eq, %arg1, %c0_i32 : i32
    %5 = arith.extui %4 : i1 to i32
    %c0_i32_4 = arith.constant 0 : i32
    %6 = arith.cmpi ne, %5, %c0_i32_4 : i32
    scf.if %6 {
      %c0_9 = arith.constant 0 : index
      %c0_10 = arith.constant 0 : index
      %13 = vector.load %arg5[%c0_9, %c0_10] : memref<16x16xf32, #tpu.memory_space<vmem>>, vector<16x16xf32>
      tpu.vector_store %arg5[%c0_9, %c0_10], %2 {strides = array<i32>} : memref<16x16xf32, #tpu.memory_space<vmem>>, vector<16x16xf32>,
      %c0_11 = arith.constant 0 : index
      %c0_12 = arith.constant 0 : index
      %14 = vector.load %arg6[%c0_11, %c0_12] : memref<16x16xf32, #tpu.memory_space<vmem>>, vector<16x16xf32>
      tpu.vector_store %arg6[%c0_11, %c0_12], %3 {strides = array<i32>} : memref<16x16xf32, #tpu.memory_space<vmem>>, vector<16x16xf32>,
    } else {
    }
    %c0_i32_5 = arith.constant 0 : i32
    %7 = arith.cmpi sgt, %arg1, %c0_i32_5 : i32
    %8 = arith.extui %7 : i1 to i32
    %c0_i32_6 = arith.constant 0 : i32
    %9 = arith.cmpi ne, %8, %c0_i32_6 : i32
    scf.if %9 {
      %c0_9 = arith.constant 0 : index
      %c0_10 = arith.constant 0 : index
      %13 = vector.load %arg5[%c0_9, %c0_10] : memref<16x16xf32, #tpu.memory_space<vmem>>, vector<16x16xf32>
      %14 = arith.maximumf %13, %2 : vector<16x16xf32>
      %c0_11 = arith.constant 0 : index
      %c0_12 = arith.constant 0 : index
      %15 = vector.load %arg5[%c0_11, %c0_12] : memref<16x16xf32, #tpu.memory_space<vmem>>, vector<16x16xf32>
      tpu.vector_store %arg5[%c0_11, %c0_12], %14 {strides = array<i32>} : memref<16x16xf32, #tpu.memory_space<vmem>>, vector<16x16xf32>,
      %c0_13 = arith.constant 0 : index
      %c0_14 = arith.constant 0 : index
      %16 = vector.load %arg6[%c0_13, %c0_14] : memref<16x16xf32, #tpu.memory_space<vmem>>, vector<16x16xf32>
      %17 = arith.addf %16, %3 : vector<16x16xf32>
      %c0_15 = arith.constant 0 : index
      %c0_16 = arith.constant 0 : index
      %18 = vector.load %arg6[%c0_15, %c0_16] : memref<16x16xf32, #tpu.memory_space<vmem>>, vector<16x16xf32>
      tpu.vector_store %arg6[%c0_15, %c0_16], %17 {strides = array<i32>} : memref<16x16xf32, #tpu.memory_space<vmem>>, vector<16x16xf32>,
    } else {
    }
    %c0_i32_7 = arith.constant 0 : i32
    %10 = arith.cmpi eq, %arg1, %c0_i32_7 : i32
    %11 = arith.extui %10 : i1 to i32
    %c0_i32_8 = arith.constant 0 : i32
    %12 = arith.cmpi ne, %11, %c0_i32_8 : i32
    scf.if %12 {
      %cst_9 = arith.constant 0.000000e+00 : f32
      %13 = vector.broadcast %cst_9 : f32 to vector<2x22x22xf32>
      %c0_10 = arith.constant 0 : index
      %c0_11 = arith.constant 0 : index
      %c0_12 = arith.constant 0 : index
      %14 = vector.load %arg7[%c0_10, %c0_11, %c0_12] : memref<2x22x22xf32, #tpu.memory_space<vmem>>, vector<2x22x22xf32>
      tpu.vector_store %arg7[%c0_10, %c0_11, %c0_12], %13 {strides = array<i32>} : memref<2x22x22xf32, #tpu.memory_space<vmem>>, vector<2x22x22xf32>,
      %c0_13 = arith.constant 0 : index
      %c0_14 = arith.constant 0 : index
      %15 = vector.load %arg5[%c0_13, %c0_14] : memref<16x16xf32, #tpu.memory_space<vmem>>, vector<16x16xf32>
      %c0_15 = arith.constant 0 : index
      %c3 = arith.constant 3 : index
      %c3_16 = arith.constant 3 : index
      %16 = vector.load %arg7[%c0_15, %c3, %c3_16] : memref<2x22x22xf32, #tpu.memory_space<vmem>>, vector<1x16x16xf32>
      %17 = vector.shape_cast %16 : vector<1x16x16xf32> to vector<16x16xf32>
      %18 = vector.shape_cast %15 : vector<16x16xf32> to vector<1x16x16xf32>
      tpu.vector_store %arg7[%c0_15, %c3, %c3_16], %18 {strides = array<i32>} : memref<2x22x22xf32, #tpu.memory_space<vmem>>, vector<1x16x16xf32>,
      %c0_17 = arith.constant 0 : index
      %c0_18 = arith.constant 0 : index
      %19 = vector.load %arg6[%c0_17, %c0_18] : memref<16x16xf32, #tpu.memory_space<vmem>>, vector<16x16xf32>
      %c1 = arith.constant 1 : index
      %c3_19 = arith.constant 3 : index
      %c3_20 = arith.constant 3 : index
      %20 = vector.load %arg7[%c1, %c3_19, %c3_20] : memref<2x22x22xf32, #tpu.memory_space<vmem>>, vector<1x16x16xf32>
      %21 = vector.shape_cast %20 : vector<1x16x16xf32> to vector<16x16xf32>
      %22 = vector.shape_cast %19 : vector<16x16xf32> to vector<1x16x16xf32>
      tpu.vector_store %arg7[%c1, %c3_19, %c3_20], %22 {strides = array<i32>} : memref<2x22x22xf32, #tpu.memory_space<vmem>>, vector<1x16x16xf32>,
      %cst_21 = arith.constant 0.000000e+00 : f32
      %23 = vector.broadcast %cst_21 : f32 to vector<16x16xf32>
      %c0_22 = arith.constant 0 : index
      %24 = memref.load %arg3[%c0_22] : memref<98xf32, #tpu.memory_space<smem>>
      %c0_23 = arith.constant 0 : index
      %c0_24 = arith.constant 0 : index
      %c0_25 = arith.constant 0 : index
      %25 = vector.load %arg7[%c0_23, %c0_24, %c0_25] : memref<2x22x22xf32, #tpu.memory_space<vmem>>, vector<1x16x16xf32>
      %26 = vector.shape_cast %25 : vector<1x16x16xf32> to vector<16x16xf32>
      %27 = vector.broadcast %24 : f32 to vector<16x16xf32>
      %28 = arith.mulf %27, %26 : vector<16x16xf32>
      %29 = arith.addf %23, %28 : vector<16x16xf32>
      %c1_26 = arith.constant 1 : index
      %30 = memref.load %arg3[%c1_26] : memref<98xf32, #tpu.memory_space<smem>>
      %c0_27 = arith.constant 0 : index
      %c0_28 = arith.constant 0 : index
      %c1_29 = arith.constant 1 : index
      %31 = vector.load %arg7[%c0_27, %c0_28, %c1_29] : memref<2x22x22xf32, #tpu.memory_space<vmem>>, vector<1x16x16xf32>
      %32 = vector.shape_cast %31 : vector<1x16x16xf32> to vector<16x16xf32>
      %33 = vector.broadcast %30 : f32 to vector<16x16xf32>
      %34 = arith.mulf %33, %32 : vector<16x16xf32>
      %35 = arith.addf %29, %34 : vector<16x16xf32>
      %c2 = arith.constant 2 : index
      %36 = memref.load %arg3[%c2] : memref<98xf32, #tpu.memory_space<smem>>
      %c0_30 = arith.constant 0 : index
      %c0_31 = arith.constant 0 : index
      %c2_32 = arith.constant 2 : index
      %37 = vector.load %arg7[%c0_30, %c0_31, %c2_32] : memref<2x22x22xf32, #tpu.memory_space<vmem>>, vector<1x16x16xf32>
      %38 = vector.shape_cast %37 : vector<1x16x16xf32> to vector<16x16xf32>
      %39 = vector.broadcast %36 : f32 to vector<16x16xf32>
      %40 = arith.mulf %39, %38 : vector<16x16xf32>
      %41 = arith.addf %35, %40 : vector<16x16xf32>
      %c3_33 = arith.constant 3 : index
      %42 = memref.load %arg3[%c3_33] : memref<98xf32, #tpu.memory_space<smem>>
      %c0_34 = arith.constant 0 : index
      %c0_35 = arith.constant 0 : index
      %c3_36 = arith.constant 3 : index
      %43 = vector.load %arg7[%c0_34, %c0_35, %c3_36] : memref<2x22x22xf32, #tpu.memory_space<vmem>>, vector<1x16x16xf32>
      %44 = vector.shape_cast %43 : vector<1x16x16xf32> to vector<16x16xf32>
      %45 = vector.broadcast %42 : f32 to vector<16x16xf32>
      %46 = arith.mulf %45, %44 : vector<16x16xf32>
      %47 = arith.addf %41, %46 : vector<16x16xf32>
      %c4 = arith.constant 4 : index
      %48 = memref.load %arg3[%c4] : memref<98xf32, #tpu.memory_space<smem>>
      %c0_37 = arith.constant 0 : index
      %c0_38 = arith.constant 0 : index
      %c4_39 = arith.constant 4 : index
      %49 = vector.load %arg7[%c0_37, %c0_38, %c4_39] : memref<2x22x22xf32, #tpu.memory_space<vmem>>, vector<1x16x16xf32>
      %50 = vector.shape_cast %49 : vector<1x16x16xf32> to vector<16x16xf32>
      %51 = vector.broadcast %48 : f32 to vector<16x16xf32>
      %52 = arith.mulf %51, %50 : vector<16x16xf32>
      %53 = arith.addf %47, %52 : vector<16x16xf32>
      %c5 = arith.constant 5 : index
      %54 = memref.load %arg3[%c5] : memref<98xf32, #tpu.memory_space<smem>>
      %c0_40 = arith.constant 0 : index
      %c0_41 = arith.constant 0 : index
      %c5_42 = arith.constant 5 : index
      %55 = vector.load %arg7[%c0_40, %c0_41, %c5_42] : memref<2x22x22xf32, #tpu.memory_space<vmem>>, vector<1x16x16xf32>
      %56 = vector.shape_cast %55 : vector<1x16x16xf32> to vector<16x16xf32>
      %57 = vector.broadcast %54 : f32 to vector<16x16xf32>
      %58 = arith.mulf %57, %56 : vector<16x16xf32>
      %59 = arith.addf %53, %58 : vector<16x16xf32>
      %c6 = arith.constant 6 : index
      %60 = memref.load %arg3[%c6] : memref<98xf32, #tpu.memory_space<smem>>
      %c0_43 = arith.constant 0 : index
      %c0_44 = arith.constant 0 : index
      %c6_45 = arith.constant 6 : index
      %61 = vector.load %arg7[%c0_43, %c0_44, %c6_45] : memref<2x22x22xf32, #tpu.memory_space<vmem>>, vector<1x16x16xf32>
      %62 = vector.shape_cast %61 : vector<1x16x16xf32> to vector<16x16xf32>
      %63 = vector.broadcast %60 : f32 to vector<16x16xf32>
      %64 = arith.mulf %63, %62 : vector<16x16xf32>
      %65 = arith.addf %59, %64 : vector<16x16xf32>
      %c7 = arith.constant 7 : index
      %66 = memref.load %arg3[%c7] : memref<98xf32, #tpu.memory_space<smem>>
      %c0_46 = arith.constant 0 : index
      %c1_47 = arith.constant 1 : index
      %c0_48 = arith.constant 0 : index
      %67 = vector.load %arg7[%c0_46, %c1_47, %c0_48] : memref<2x22x22xf32, #tpu.memory_space<vmem>>, vector<1x16x16xf32>
      %68 = vector.shape_cast %67 : vector<1x16x16xf32> to vector<16x16xf32>
      %69 = vector.broadcast %66 : f32 to vector<16x16xf32>
      %70 = arith.mulf %69, %68 : vector<16x16xf32>
      %71 = arith.addf %65, %70 : vector<16x16xf32>
      %c8 = arith.constant 8 : index
      %72 = memref.load %arg3[%c8] : memref<98xf32, #tpu.memory_space<smem>>
      %c0_49 = arith.constant 0 : index
      %c1_50 = arith.constant 1 : index
      %c1_51 = arith.constant 1 : index
      %73 = vector.load %arg7[%c0_49, %c1_50, %c1_51] : memref<2x22x22xf32, #tpu.memory_space<vmem>>, vector<1x16x16xf32>
      %74 = vector.shape_cast %73 : vector<1x16x16xf32> to vector<16x16xf32>
      %75 = vector.broadcast %72 : f32 to vector<16x16xf32>
      %76 = arith.mulf %75, %74 : vector<16x16xf32>
      %77 = arith.addf %71, %76 : vector<16x16xf32>
      %c9 = arith.constant 9 : index
      %78 = memref.load %arg3[%c9] : memref<98xf32, #tpu.memory_space<smem>>
      %c0_52 = arith.constant 0 : index
      %c1_53 = arith.constant 1 : index
      %c2_54 = arith.constant 2 : index
      %79 = vector.load %arg7[%c0_52, %c1_53, %c2_54] : memref<2x22x22xf32, #tpu.memory_space<vmem>>, vector<1x16x16xf32>
      %80 = vector.shape_cast %79 : vector<1x16x16xf32> to vector<16x16xf32>
      %81 = vector.broadcast %78 : f32 to vector<16x16xf32>
      %82 = arith.mulf %81, %80 : vector<16x16xf32>
      %83 = arith.addf %77, %82 : vector<16x16xf32>
      %c10 = arith.constant 10 : index
      %84 = memref.load %arg3[%c10] : memref<98xf32, #tpu.memory_space<smem>>
      %c0_55 = arith.constant 0 : index
      %c1_56 = arith.constant 1 : index
      %c3_57 = arith.constant 3 : index
      %85 = vector.load %arg7[%c0_55, %c1_56, %c3_57] : memref<2x22x22xf32, #tpu.memory_space<vmem>>, vector<1x16x16xf32>
      %86 = vector.shape_cast %85 : vector<1x16x16xf32> to vector<16x16xf32>
      %87 = vector.broadcast %84 : f32 to vector<16x16xf32>
      %88 = arith.mulf %87, %86 : vector<16x16xf32>
      %89 = arith.addf %83, %88 : vector<16x16xf32>
      %c11 = arith.constant 11 : index
      %90 = memref.load %arg3[%c11] : memref<98xf32, #tpu.memory_space<smem>>
      %c0_58 = arith.constant 0 : index
      %c1_59 = arith.constant 1 : index
      %c4_60 = arith.constant 4 : index
      %91 = vector.load %arg7[%c0_58, %c1_59, %c4_60] : memref<2x22x22xf32, #tpu.memory_space<vmem>>, vector<1x16x16xf32>
      %92 = vector.shape_cast %91 : vector<1x16x16xf32> to vector<16x16xf32>
      %93 = vector.broadcast %90 : f32 to vector<16x16xf32>
      %94 = arith.mulf %93, %92 : vector<16x16xf32>
      %95 = arith.addf %89, %94 : vector<16x16xf32>
      %c12 = arith.constant 12 : index
      %96 = memref.load %arg3[%c12] : memref<98xf32, #tpu.memory_space<smem>>
      %c0_61 = arith.constant 0 : index
      %c1_62 = arith.constant 1 : index
      %c5_63 = arith.constant 5 : index
      %97 = vector.load %arg7[%c0_61, %c1_62, %c5_63] : memref<2x22x22xf32, #tpu.memory_space<vmem>>, vector<1x16x16xf32>
      %98 = vector.shape_cast %97 : vector<1x16x16xf32> to vector<16x16xf32>
      %99 = vector.broadcast %96 : f32 to vector<16x16xf32>
      %100 = arith.mulf %99, %98 : vector<16x16xf32>
      %101 = arith.addf %95, %100 : vector<16x16xf32>
      %c13 = arith.constant 13 : index
      %102 = memref.load %arg3[%c13] : memref<98xf32, #tpu.memory_space<smem>>
      %c0_64 = arith.constant 0 : index
      %c1_65 = arith.constant 1 : index
      %c6_66 = arith.constant 6 : index
      %103 = vector.load %arg7[%c0_64, %c1_65, %c6_66] : memref<2x22x22xf32, #tpu.memory_space<vmem>>, vector<1x16x16xf32>
      %104 = vector.shape_cast %103 : vector<1x16x16xf32> to vector<16x16xf32>
      %105 = vector.broadcast %102 : f32 to vector<16x16xf32>
      %106 = arith.mulf %105, %104 : vector<16x16xf32>
      %107 = arith.addf %101, %106 : vector<16x16xf32>
      %c14 = arith.constant 14 : index
      %108 = memref.load %arg3[%c14] : memref<98xf32, #tpu.memory_space<smem>>
      %c0_67 = arith.constant 0 : index
      %c2_68 = arith.constant 2 : index
      %c0_69 = arith.constant 0 : index
      %109 = vector.load %arg7[%c0_67, %c2_68, %c0_69] : memref<2x22x22xf32, #tpu.memory_space<vmem>>, vector<1x16x16xf32>
      %110 = vector.shape_cast %109 : vector<1x16x16xf32> to vector<16x16xf32>
      %111 = vector.broadcast %108 : f32 to vector<16x16xf32>
      %112 = arith.mulf %111, %110 : vector<16x16xf32>
      %113 = arith.addf %107, %112 : vector<16x16xf32>
      %c15 = arith.constant 15 : index
      %114 = memref.load %arg3[%c15] : memref<98xf32, #tpu.memory_space<smem>>
      %c0_70 = arith.constant 0 : index
      %c2_71 = arith.constant 2 : index
      %c1_72 = arith.constant 1 : index
      %115 = vector.load %arg7[%c0_70, %c2_71, %c1_72] : memref<2x22x22xf32, #tpu.memory_space<vmem>>, vector<1x16x16xf32>
      %116 = vector.shape_cast %115 : vector<1x16x16xf32> to vector<16x16xf32>
      %117 = vector.broadcast %114 : f32 to vector<16x16xf32>
      %118 = arith.mulf %117, %116 : vector<16x16xf32>
      %119 = arith.addf %113, %118 : vector<16x16xf32>
      %c16 = arith.constant 16 : index
      %120 = memref.load %arg3[%c16] : memref<98xf32, #tpu.memory_space<smem>>
      %c0_73 = arith.constant 0 : index
      %c2_74 = arith.constant 2 : index
      %c2_75 = arith.constant 2 : index
      %121 = vector.load %arg7[%c0_73, %c2_74, %c2_75] : memref<2x22x22xf32, #tpu.memory_space<vmem>>, vector<1x16x16xf32>
      %122 = vector.shape_cast %121 : vector<1x16x16xf32> to vector<16x16xf32>
      %123 = vector.broadcast %120 : f32 to vector<16x16xf32>
      %124 = arith.mulf %123, %122 : vector<16x16xf32>
      %125 = arith.addf %119, %124 : vector<16x16xf32>
      %c17 = arith.constant 17 : index
      %126 = memref.load %arg3[%c17] : memref<98xf32, #tpu.memory_space<smem>>
      %c0_76 = arith.constant 0 : index
      %c2_77 = arith.constant 2 : index
      %c3_78 = arith.constant 3 : index
      %127 = vector.load %arg7[%c0_76, %c2_77, %c3_78] : memref<2x22x22xf32, #tpu.memory_space<vmem>>, vector<1x16x16xf32>
      %128 = vector.shape_cast %127 : vector<1x16x16xf32> to vector<16x16xf32>
      %129 = vector.broadcast %126 : f32 to vector<16x16xf32>
      %130 = arith.mulf %129, %128 : vector<16x16xf32>
      %131 = arith.addf %125, %130 : vector<16x16xf32>
      %c18 = arith.constant 18 : index
      %132 = memref.load %arg3[%c18] : memref<98xf32, #tpu.memory_space<smem>>
      %c0_79 = arith.constant 0 : index
      %c2_80 = arith.constant 2 : index
      %c4_81 = arith.constant 4 : index
      %133 = vector.load %arg7[%c0_79, %c2_80, %c4_81] : memref<2x22x22xf32, #tpu.memory_space<vmem>>, vector<1x16x16xf32>
      %134 = vector.shape_cast %133 : vector<1x16x16xf32> to vector<16x16xf32>
      %135 = vector.broadcast %132 : f32 to vector<16x16xf32>
      %136 = arith.mulf %135, %134 : vector<16x16xf32>
      %137 = arith.addf %131, %136 : vector<16x16xf32>
      %c19 = arith.constant 19 : index
      %138 = memref.load %arg3[%c19] : memref<98xf32, #tpu.memory_space<smem>>
      %c0_82 = arith.constant 0 : index
      %c2_83 = arith.constant 2 : index
      %c5_84 = arith.constant 5 : index
      %139 = vector.load %arg7[%c0_82, %c2_83, %c5_84] : memref<2x22x22xf32, #tpu.memory_space<vmem>>, vector<1x16x16xf32>
      %140 = vector.shape_cast %139 : vector<1x16x16xf32> to vector<16x16xf32>
      %141 = vector.broadcast %138 : f32 to vector<16x16xf32>
      %142 = arith.mulf %141, %140 : vector<16x16xf32>
      %143 = arith.addf %137, %142 : vector<16x16xf32>
      %c20 = arith.constant 20 : index
      %144 = memref.load %arg3[%c20] : memref<98xf32, #tpu.memory_space<smem>>
      %c0_85 = arith.constant 0 : index
      %c2_86 = arith.constant 2 : index
      %c6_87 = arith.constant 6 : index
      %145 = vector.load %arg7[%c0_85, %c2_86, %c6_87] : memref<2x22x22xf32, #tpu.memory_space<vmem>>, vector<1x16x16xf32>
      %146 = vector.shape_cast %145 : vector<1x16x16xf32> to vector<16x16xf32>
      %147 = vector.broadcast %144 : f32 to vector<16x16xf32>
      %148 = arith.mulf %147, %146 : vector<16x16xf32>
      %149 = arith.addf %143, %148 : vector<16x16xf32>
      %c21 = arith.constant 21 : index
      %150 = memref.load %arg3[%c21] : memref<98xf32, #tpu.memory_space<smem>>
      %c0_88 = arith.constant 0 : index
      %c3_89 = arith.constant 3 : index
      %c0_90 = arith.constant 0 : index
      %151 = vector.load %arg7[%c0_88, %c3_89, %c0_90] : memref<2x22x22xf32, #tpu.memory_space<vmem>>, vector<1x16x16xf32>
      %152 = vector.shape_cast %151 : vector<1x16x16xf32> to vector<16x16xf32>
      %153 = vector.broadcast %150 : f32 to vector<16x16xf32>
      %154 = arith.mulf %153, %152 : vector<16x16xf32>
      %155 = arith.addf %149, %154 : vector<16x16xf32>
      %c22 = arith.constant 22 : index
      %156 = memref.load %arg3[%c22] : memref<98xf32, #tpu.memory_space<smem>>
      %c0_91 = arith.constant 0 : index
      %c3_92 = arith.constant 3 : index
      %c1_93 = arith.constant 1 : index
      %157 = vector.load %arg7[%c0_91, %c3_92, %c1_93] : memref<2x22x22xf32, #tpu.memory_space<vmem>>, vector<1x16x16xf32>
      %158 = vector.shape_cast %157 : vector<1x16x16xf32> to vector<16x16xf32>
      %159 = vector.broadcast %156 : f32 to vector<16x16xf32>
      %160 = arith.mulf %159, %158 : vector<16x16xf32>
      %161 = arith.addf %155, %160 : vector<16x16xf32>
      %c23 = arith.constant 23 : index
      %162 = memref.load %arg3[%c23] : memref<98xf32, #tpu.memory_space<smem>>
      %c0_94 = arith.constant 0 : index
      %c3_95 = arith.constant 3 : index
      %c2_96 = arith.constant 2 : index
      %163 = vector.load %arg7[%c0_94, %c3_95, %c2_96] : memref<2x22x22xf32, #tpu.memory_space<vmem>>, vector<1x16x16xf32>
      %164 = vector.shape_cast %163 : vector<1x16x16xf32> to vector<16x16xf32>
      %165 = vector.broadcast %162 : f32 to vector<16x16xf32>
      %166 = arith.mulf %165, %164 : vector<16x16xf32>
      %167 = arith.addf %161, %166 : vector<16x16xf32>
      %c24 = arith.constant 24 : index
      %168 = memref.load %arg3[%c24] : memref<98xf32, #tpu.memory_space<smem>>
      %c0_97 = arith.constant 0 : index
      %c3_98 = arith.constant 3 : index
      %c3_99 = arith.constant 3 : index
      %169 = vector.load %arg7[%c0_97, %c3_98, %c3_99] : memref<2x22x22xf32, #tpu.memory_space<vmem>>, vector<1x16x16xf32>
      %170 = vector.shape_cast %169 : vector<1x16x16xf32> to vector<16x16xf32>
      %171 = vector.broadcast %168 : f32 to vector<16x16xf32>
      %172 = arith.mulf %171, %170 : vector<16x16xf32>
      %173 = arith.addf %167, %172 : vector<16x16xf32>
      %c25 = arith.constant 25 : index
      %174 = memref.load %arg3[%c25] : memref<98xf32, #tpu.memory_space<smem>>
      %c0_100 = arith.constant 0 : index
      %c3_101 = arith.constant 3 : index
      %c4_102 = arith.constant 4 : index
      %175 = vector.load %arg7[%c0_100, %c3_101, %c4_102] : memref<2x22x22xf32, #tpu.memory_space<vmem>>, vector<1x16x16xf32>
      %176 = vector.shape_cast %175 : vector<1x16x16xf32> to vector<16x16xf32>
      %177 = vector.broadcast %174 : f32 to vector<16x16xf32>
      %178 = arith.mulf %177, %176 : vector<16x16xf32>
      %179 = arith.addf %173, %178 : vector<16x16xf32>
      %c26 = arith.constant 26 : index
      %180 = memref.load %arg3[%c26] : memref<98xf32, #tpu.memory_space<smem>>
      %c0_103 = arith.constant 0 : index
      %c3_104 = arith.constant 3 : index
      %c5_105 = arith.constant 5 : index
      %181 = vector.load %arg7[%c0_103, %c3_104, %c5_105] : memref<2x22x22xf32, #tpu.memory_space<vmem>>, vector<1x16x16xf32>
      %182 = vector.shape_cast %181 : vector<1x16x16xf32> to vector<16x16xf32>
      %183 = vector.broadcast %180 : f32 to vector<16x16xf32>
      %184 = arith.mulf %183, %182 : vector<16x16xf32>
      %185 = arith.addf %179, %184 : vector<16x16xf32>
      %c27 = arith.constant 27 : index
      %186 = memref.load %arg3[%c27] : memref<98xf32, #tpu.memory_space<smem>>
      %c0_106 = arith.constant 0 : index
      %c3_107 = arith.constant 3 : index
      %c6_108 = arith.constant 6 : index
      %187 = vector.load %arg7[%c0_106, %c3_107, %c6_108] : memref<2x22x22xf32, #tpu.memory_space<vmem>>, vector<1x16x16xf32>
      %188 = vector.shape_cast %187 : vector<1x16x16xf32> to vector<16x16xf32>
      %189 = vector.broadcast %186 : f32 to vector<16x16xf32>
      %190 = arith.mulf %189, %188 : vector<16x16xf32>
      %191 = arith.addf %185, %190 : vector<16x16xf32>
      %c28 = arith.constant 28 : index
      %192 = memref.load %arg3[%c28] : memref<98xf32, #tpu.memory_space<smem>>
      %c0_109 = arith.constant 0 : index
      %c4_110 = arith.constant 4 : index
      %c0_111 = arith.constant 0 : index
      %193 = vector.load %arg7[%c0_109, %c4_110, %c0_111] : memref<2x22x22xf32, #tpu.memory_space<vmem>>, vector<1x16x16xf32>
      %194 = vector.shape_cast %193 : vector<1x16x16xf32> to vector<16x16xf32>
      %195 = vector.broadcast %192 : f32 to vector<16x16xf32>
      %196 = arith.mulf %195, %194 : vector<16x16xf32>
      %197 = arith.addf %191, %196 : vector<16x16xf32>
      %c29 = arith.constant 29 : index
      %198 = memref.load %arg3[%c29] : memref<98xf32, #tpu.memory_space<smem>>
      %c0_112 = arith.constant 0 : index
      %c4_113 = arith.constant 4 : index
      %c1_114 = arith.constant 1 : index
      %199 = vector.load %arg7[%c0_112, %c4_113, %c1_114] : memref<2x22x22xf32, #tpu.memory_space<vmem>>, vector<1x16x16xf32>
      %200 = vector.shape_cast %199 : vector<1x16x16xf32> to vector<16x16xf32>
      %201 = vector.broadcast %198 : f32 to vector<16x16xf32>
      %202 = arith.mulf %201, %200 : vector<16x16xf32>
      %203 = arith.addf %197, %202 : vector<16x16xf32>
      %c30 = arith.constant 30 : index
      %204 = memref.load %arg3[%c30] : memref<98xf32, #tpu.memory_space<smem>>
      %c0_115 = arith.constant 0 : index
      %c4_116 = arith.constant 4 : index
      %c2_117 = arith.constant 2 : index
      %205 = vector.load %arg7[%c0_115, %c4_116, %c2_117] : memref<2x22x22xf32, #tpu.memory_space<vmem>>, vector<1x16x16xf32>
      %206 = vector.shape_cast %205 : vector<1x16x16xf32> to vector<16x16xf32>
      %207 = vector.broadcast %204 : f32 to vector<16x16xf32>
      %208 = arith.mulf %207, %206 : vector<16x16xf32>
      %209 = arith.addf %203, %208 : vector<16x16xf32>
      %c31 = arith.constant 31 : index
      %210 = memref.load %arg3[%c31] : memref<98xf32, #tpu.memory_space<smem>>
      %c0_118 = arith.constant 0 : index
      %c4_119 = arith.constant 4 : index
      %c3_120 = arith.constant 3 : index
      %211 = vector.load %arg7[%c0_118, %c4_119, %c3_120] : memref<2x22x22xf32, #tpu.memory_space<vmem>>, vector<1x16x16xf32>
      %212 = vector.shape_cast %211 : vector<1x16x16xf32> to vector<16x16xf32>
      %213 = vector.broadcast %210 : f32 to vector<16x16xf32>
      %214 = arith.mulf %213, %212 : vector<16x16xf32>
      %215 = arith.addf %209, %214 : vector<16x16xf32>
      %c32 = arith.constant 32 : index
      %216 = memref.load %arg3[%c32] : memref<98xf32, #tpu.memory_space<smem>>
      %c0_121 = arith.constant 0 : index
      %c4_122 = arith.constant 4 : index
      %c4_123 = arith.constant 4 : index
      %217 = vector.load %arg7[%c0_121, %c4_122, %c4_123] : memref<2x22x22xf32, #tpu.memory_space<vmem>>, vector<1x16x16xf32>
      %218 = vector.shape_cast %217 : vector<1x16x16xf32> to vector<16x16xf32>
      %219 = vector.broadcast %216 : f32 to vector<16x16xf32>
      %220 = arith.mulf %219, %218 : vector<16x16xf32>
      %221 = arith.addf %215, %220 : vector<16x16xf32>
      %c33 = arith.constant 33 : index
      %222 = memref.load %arg3[%c33] : memref<98xf32, #tpu.memory_space<smem>>
      %c0_124 = arith.constant 0 : index
      %c4_125 = arith.constant 4 : index
      %c5_126 = arith.constant 5 : index
      %223 = vector.load %arg7[%c0_124, %c4_125, %c5_126] : memref<2x22x22xf32, #tpu.memory_space<vmem>>, vector<1x16x16xf32>
      %224 = vector.shape_cast %223 : vector<1x16x16xf32> to vector<16x16xf32>
      %225 = vector.broadcast %222 : f32 to vector<16x16xf32>
      %226 = arith.mulf %225, %224 : vector<16x16xf32>
      %227 = arith.addf %221, %226 : vector<16x16xf32>
      %c34 = arith.constant 34 : index
      %228 = memref.load %arg3[%c34] : memref<98xf32, #tpu.memory_space<smem>>
      %c0_127 = arith.constant 0 : index
      %c4_128 = arith.constant 4 : index
      %c6_129 = arith.constant 6 : index
      %229 = vector.load %arg7[%c0_127, %c4_128, %c6_129] : memref<2x22x22xf32, #tpu.memory_space<vmem>>, vector<1x16x16xf32>
      %230 = vector.shape_cast %229 : vector<1x16x16xf32> to vector<16x16xf32>
      %231 = vector.broadcast %228 : f32 to vector<16x16xf32>
      %232 = arith.mulf %231, %230 : vector<16x16xf32>
      %233 = arith.addf %227, %232 : vector<16x16xf32>
      %c35 = arith.constant 35 : index
      %234 = memref.load %arg3[%c35] : memref<98xf32, #tpu.memory_space<smem>>
      %c0_130 = arith.constant 0 : index
      %c5_131 = arith.constant 5 : index
      %c0_132 = arith.constant 0 : index
      %235 = vector.load %arg7[%c0_130, %c5_131, %c0_132] : memref<2x22x22xf32, #tpu.memory_space<vmem>>, vector<1x16x16xf32>
      %236 = vector.shape_cast %235 : vector<1x16x16xf32> to vector<16x16xf32>
      %237 = vector.broadcast %234 : f32 to vector<16x16xf32>
      %238 = arith.mulf %237, %236 : vector<16x16xf32>
      %239 = arith.addf %233, %238 : vector<16x16xf32>
      %c36 = arith.constant 36 : index
      %240 = memref.load %arg3[%c36] : memref<98xf32, #tpu.memory_space<smem>>
      %c0_133 = arith.constant 0 : index
      %c5_134 = arith.constant 5 : index
      %c1_135 = arith.constant 1 : index
      %241 = vector.load %arg7[%c0_133, %c5_134, %c1_135] : memref<2x22x22xf32, #tpu.memory_space<vmem>>, vector<1x16x16xf32>
      %242 = vector.shape_cast %241 : vector<1x16x16xf32> to vector<16x16xf32>
      %243 = vector.broadcast %240 : f32 to vector<16x16xf32>
      %244 = arith.mulf %243, %242 : vector<16x16xf32>
      %245 = arith.addf %239, %244 : vector<16x16xf32>
      %c37 = arith.constant 37 : index
      %246 = memref.load %arg3[%c37] : memref<98xf32, #tpu.memory_space<smem>>
      %c0_136 = arith.constant 0 : index
      %c5_137 = arith.constant 5 : index
      %c2_138 = arith.constant 2 : index
      %247 = vector.load %arg7[%c0_136, %c5_137, %c2_138] : memref<2x22x22xf32, #tpu.memory_space<vmem>>, vector<1x16x16xf32>
      %248 = vector.shape_cast %247 : vector<1x16x16xf32> to vector<16x16xf32>
      %249 = vector.broadcast %246 : f32 to vector<16x16xf32>
      %250 = arith.mulf %249, %248 : vector<16x16xf32>
      %251 = arith.addf %245, %250 : vector<16x16xf32>
      %c38 = arith.constant 38 : index
      %252 = memref.load %arg3[%c38] : memref<98xf32, #tpu.memory_space<smem>>
      %c0_139 = arith.constant 0 : index
      %c5_140 = arith.constant 5 : index
      %c3_141 = arith.constant 3 : index
      %253 = vector.load %arg7[%c0_139, %c5_140, %c3_141] : memref<2x22x22xf32, #tpu.memory_space<vmem>>, vector<1x16x16xf32>
      %254 = vector.shape_cast %253 : vector<1x16x16xf32> to vector<16x16xf32>
      %255 = vector.broadcast %252 : f32 to vector<16x16xf32>
      %256 = arith.mulf %255, %254 : vector<16x16xf32>
      %257 = arith.addf %251, %256 : vector<16x16xf32>
      %c39 = arith.constant 39 : index
      %258 = memref.load %arg3[%c39] : memref<98xf32, #tpu.memory_space<smem>>
      %c0_142 = arith.constant 0 : index
      %c5_143 = arith.constant 5 : index
      %c4_144 = arith.constant 4 : index
      %259 = vector.load %arg7[%c0_142, %c5_143, %c4_144] : memref<2x22x22xf32, #tpu.memory_space<vmem>>, vector<1x16x16xf32>
      %260 = vector.shape_cast %259 : vector<1x16x16xf32> to vector<16x16xf32>
      %261 = vector.broadcast %258 : f32 to vector<16x16xf32>
      %262 = arith.mulf %261, %260 : vector<16x16xf32>
      %263 = arith.addf %257, %262 : vector<16x16xf32>
      %c40 = arith.constant 40 : index
      %264 = memref.load %arg3[%c40] : memref<98xf32, #tpu.memory_space<smem>>
      %c0_145 = arith.constant 0 : index
      %c5_146 = arith.constant 5 : index
      %c5_147 = arith.constant 5 : index
      %265 = vector.load %arg7[%c0_145, %c5_146, %c5_147] : memref<2x22x22xf32, #tpu.memory_space<vmem>>, vector<1x16x16xf32>
      %266 = vector.shape_cast %265 : vector<1x16x16xf32> to vector<16x16xf32>
      %267 = vector.broadcast %264 : f32 to vector<16x16xf32>
      %268 = arith.mulf %267, %266 : vector<16x16xf32>
      %269 = arith.addf %263, %268 : vector<16x16xf32>
      %c41 = arith.constant 41 : index
      %270 = memref.load %arg3[%c41] : memref<98xf32, #tpu.memory_space<smem>>
      %c0_148 = arith.constant 0 : index
      %c5_149 = arith.constant 5 : index
      %c6_150 = arith.constant 6 : index
      %271 = vector.load %arg7[%c0_148, %c5_149, %c6_150] : memref<2x22x22xf32, #tpu.memory_space<vmem>>, vector<1x16x16xf32>
      %272 = vector.shape_cast %271 : vector<1x16x16xf32> to vector<16x16xf32>
      %273 = vector.broadcast %270 : f32 to vector<16x16xf32>
      %274 = arith.mulf %273, %272 : vector<16x16xf32>
      %275 = arith.addf %269, %274 : vector<16x16xf32>
      %c42 = arith.constant 42 : index
      %276 = memref.load %arg3[%c42] : memref<98xf32, #tpu.memory_space<smem>>
      %c0_151 = arith.constant 0 : index
      %c6_152 = arith.constant 6 : index
      %c0_153 = arith.constant 0 : index
      %277 = vector.load %arg7[%c0_151, %c6_152, %c0_153] : memref<2x22x22xf32, #tpu.memory_space<vmem>>, vector<1x16x16xf32>
      %278 = vector.shape_cast %277 : vector<1x16x16xf32> to vector<16x16xf32>
      %279 = vector.broadcast %276 : f32 to vector<16x16xf32>
      %280 = arith.mulf %279, %278 : vector<16x16xf32>
      %281 = arith.addf %275, %280 : vector<16x16xf32>
      %c43 = arith.constant 43 : index
      %282 = memref.load %arg3[%c43] : memref<98xf32, #tpu.memory_space<smem>>
      %c0_154 = arith.constant 0 : index
      %c6_155 = arith.constant 6 : index
      %c1_156 = arith.constant 1 : index
      %283 = vector.load %arg7[%c0_154, %c6_155, %c1_156] : memref<2x22x22xf32, #tpu.memory_space<vmem>>, vector<1x16x16xf32>
      %284 = vector.shape_cast %283 : vector<1x16x16xf32> to vector<16x16xf32>
      %285 = vector.broadcast %282 : f32 to vector<16x16xf32>
      %286 = arith.mulf %285, %284 : vector<16x16xf32>
      %287 = arith.addf %281, %286 : vector<16x16xf32>
      %c44 = arith.constant 44 : index
      %288 = memref.load %arg3[%c44] : memref<98xf32, #tpu.memory_space<smem>>
      %c0_157 = arith.constant 0 : index
      %c6_158 = arith.constant 6 : index
      %c2_159 = arith.constant 2 : index
      %289 = vector.load %arg7[%c0_157, %c6_158, %c2_159] : memref<2x22x22xf32, #tpu.memory_space<vmem>>, vector<1x16x16xf32>
      %290 = vector.shape_cast %289 : vector<1x16x16xf32> to vector<16x16xf32>
      %291 = vector.broadcast %288 : f32 to vector<16x16xf32>
      %292 = arith.mulf %291, %290 : vector<16x16xf32>
      %293 = arith.addf %287, %292 : vector<16x16xf32>
      %c45 = arith.constant 45 : index
      %294 = memref.load %arg3[%c45] : memref<98xf32, #tpu.memory_space<smem>>
      %c0_160 = arith.constant 0 : index
      %c6_161 = arith.constant 6 : index
      %c3_162 = arith.constant 3 : index
      %295 = vector.load %arg7[%c0_160, %c6_161, %c3_162] : memref<2x22x22xf32, #tpu.memory_space<vmem>>, vector<1x16x16xf32>
      %296 = vector.shape_cast %295 : vector<1x16x16xf32> to vector<16x16xf32>
      %297 = vector.broadcast %294 : f32 to vector<16x16xf32>
      %298 = arith.mulf %297, %296 : vector<16x16xf32>
      %299 = arith.addf %293, %298 : vector<16x16xf32>
      %c46 = arith.constant 46 : index
      %300 = memref.load %arg3[%c46] : memref<98xf32, #tpu.memory_space<smem>>
      %c0_163 = arith.constant 0 : index
      %c6_164 = arith.constant 6 : index
      %c4_165 = arith.constant 4 : index
      %301 = vector.load %arg7[%c0_163, %c6_164, %c4_165] : memref<2x22x22xf32, #tpu.memory_space<vmem>>, vector<1x16x16xf32>
      %302 = vector.shape_cast %301 : vector<1x16x16xf32> to vector<16x16xf32>
      %303 = vector.broadcast %300 : f32 to vector<16x16xf32>
      %304 = arith.mulf %303, %302 : vector<16x16xf32>
      %305 = arith.addf %299, %304 : vector<16x16xf32>
      %c47 = arith.constant 47 : index
      %306 = memref.load %arg3[%c47] : memref<98xf32, #tpu.memory_space<smem>>
      %c0_166 = arith.constant 0 : index
      %c6_167 = arith.constant 6 : index
      %c5_168 = arith.constant 5 : index
      %307 = vector.load %arg7[%c0_166, %c6_167, %c5_168] : memref<2x22x22xf32, #tpu.memory_space<vmem>>, vector<1x16x16xf32>
      %308 = vector.shape_cast %307 : vector<1x16x16xf32> to vector<16x16xf32>
      %309 = vector.broadcast %306 : f32 to vector<16x16xf32>
      %310 = arith.mulf %309, %308 : vector<16x16xf32>
      %311 = arith.addf %305, %310 : vector<16x16xf32>
      %c48 = arith.constant 48 : index
      %312 = memref.load %arg3[%c48] : memref<98xf32, #tpu.memory_space<smem>>
      %c0_169 = arith.constant 0 : index
      %c6_170 = arith.constant 6 : index
      %c6_171 = arith.constant 6 : index
      %313 = vector.load %arg7[%c0_169, %c6_170, %c6_171] : memref<2x22x22xf32, #tpu.memory_space<vmem>>, vector<1x16x16xf32>
      %314 = vector.shape_cast %313 : vector<1x16x16xf32> to vector<16x16xf32>
      %315 = vector.broadcast %312 : f32 to vector<16x16xf32>
      %316 = arith.mulf %315, %314 : vector<16x16xf32>
      %317 = arith.addf %311, %316 : vector<16x16xf32>
      %c49 = arith.constant 49 : index
      %318 = memref.load %arg3[%c49] : memref<98xf32, #tpu.memory_space<smem>>
      %c1_172 = arith.constant 1 : index
      %c0_173 = arith.constant 0 : index
      %c0_174 = arith.constant 0 : index
      %319 = vector.load %arg7[%c1_172, %c0_173, %c0_174] : memref<2x22x22xf32, #tpu.memory_space<vmem>>, vector<1x16x16xf32>
      %320 = vector.shape_cast %319 : vector<1x16x16xf32> to vector<16x16xf32>
      %321 = vector.broadcast %318 : f32 to vector<16x16xf32>
      %322 = arith.mulf %321, %320 : vector<16x16xf32>
      %323 = arith.addf %317, %322 : vector<16x16xf32>
      %c50 = arith.constant 50 : index
      %324 = memref.load %arg3[%c50] : memref<98xf32, #tpu.memory_space<smem>>
      %c1_175 = arith.constant 1 : index
      %c0_176 = arith.constant 0 : index
      %c1_177 = arith.constant 1 : index
      %325 = vector.load %arg7[%c1_175, %c0_176, %c1_177] : memref<2x22x22xf32, #tpu.memory_space<vmem>>, vector<1x16x16xf32>
      %326 = vector.shape_cast %325 : vector<1x16x16xf32> to vector<16x16xf32>
      %327 = vector.broadcast %324 : f32 to vector<16x16xf32>
      %328 = arith.mulf %327, %326 : vector<16x16xf32>
      %329 = arith.addf %323, %328 : vector<16x16xf32>
      %c51 = arith.constant 51 : index
      %330 = memref.load %arg3[%c51] : memref<98xf32, #tpu.memory_space<smem>>
      %c1_178 = arith.constant 1 : index
      %c0_179 = arith.constant 0 : index
      %c2_180 = arith.constant 2 : index
      %331 = vector.load %arg7[%c1_178, %c0_179, %c2_180] : memref<2x22x22xf32, #tpu.memory_space<vmem>>, vector<1x16x16xf32>
      %332 = vector.shape_cast %331 : vector<1x16x16xf32> to vector<16x16xf32>
      %333 = vector.broadcast %330 : f32 to vector<16x16xf32>
      %334 = arith.mulf %333, %332 : vector<16x16xf32>
      %335 = arith.addf %329, %334 : vector<16x16xf32>
      %c52 = arith.constant 52 : index
      %336 = memref.load %arg3[%c52] : memref<98xf32, #tpu.memory_space<smem>>
      %c1_181 = arith.constant 1 : index
      %c0_182 = arith.constant 0 : index
      %c3_183 = arith.constant 3 : index
      %337 = vector.load %arg7[%c1_181, %c0_182, %c3_183] : memref<2x22x22xf32, #tpu.memory_space<vmem>>, vector<1x16x16xf32>
      %338 = vector.shape_cast %337 : vector<1x16x16xf32> to vector<16x16xf32>
      %339 = vector.broadcast %336 : f32 to vector<16x16xf32>
      %340 = arith.mulf %339, %338 : vector<16x16xf32>
      %341 = arith.addf %335, %340 : vector<16x16xf32>
      %c53 = arith.constant 53 : index
      %342 = memref.load %arg3[%c53] : memref<98xf32, #tpu.memory_space<smem>>
      %c1_184 = arith.constant 1 : index
      %c0_185 = arith.constant 0 : index
      %c4_186 = arith.constant 4 : index
      %343 = vector.load %arg7[%c1_184, %c0_185, %c4_186] : memref<2x22x22xf32, #tpu.memory_space<vmem>>, vector<1x16x16xf32>
      %344 = vector.shape_cast %343 : vector<1x16x16xf32> to vector<16x16xf32>
      %345 = vector.broadcast %342 : f32 to vector<16x16xf32>
      %346 = arith.mulf %345, %344 : vector<16x16xf32>
      %347 = arith.addf %341, %346 : vector<16x16xf32>
      %c54 = arith.constant 54 : index
      %348 = memref.load %arg3[%c54] : memref<98xf32, #tpu.memory_space<smem>>
      %c1_187 = arith.constant 1 : index
      %c0_188 = arith.constant 0 : index
      %c5_189 = arith.constant 5 : index
      %349 = vector.load %arg7[%c1_187, %c0_188, %c5_189] : memref<2x22x22xf32, #tpu.memory_space<vmem>>, vector<1x16x16xf32>
      %350 = vector.shape_cast %349 : vector<1x16x16xf32> to vector<16x16xf32>
      %351 = vector.broadcast %348 : f32 to vector<16x16xf32>
      %352 = arith.mulf %351, %350 : vector<16x16xf32>
      %353 = arith.addf %347, %352 : vector<16x16xf32>
      %c55 = arith.constant 55 : index
      %354 = memref.load %arg3[%c55] : memref<98xf32, #tpu.memory_space<smem>>
      %c1_190 = arith.constant 1 : index
      %c0_191 = arith.constant 0 : index
      %c6_192 = arith.constant 6 : index
      %355 = vector.load %arg7[%c1_190, %c0_191, %c6_192] : memref<2x22x22xf32, #tpu.memory_space<vmem>>, vector<1x16x16xf32>
      %356 = vector.shape_cast %355 : vector<1x16x16xf32> to vector<16x16xf32>
      %357 = vector.broadcast %354 : f32 to vector<16x16xf32>
      %358 = arith.mulf %357, %356 : vector<16x16xf32>
      %359 = arith.addf %353, %358 : vector<16x16xf32>
      %c56 = arith.constant 56 : index
      %360 = memref.load %arg3[%c56] : memref<98xf32, #tpu.memory_space<smem>>
      %c1_193 = arith.constant 1 : index
      %c1_194 = arith.constant 1 : index
      %c0_195 = arith.constant 0 : index
      %361 = vector.load %arg7[%c1_193, %c1_194, %c0_195] : memref<2x22x22xf32, #tpu.memory_space<vmem>>, vector<1x16x16xf32>
      %362 = vector.shape_cast %361 : vector<1x16x16xf32> to vector<16x16xf32>
      %363 = vector.broadcast %360 : f32 to vector<16x16xf32>
      %364 = arith.mulf %363, %362 : vector<16x16xf32>
      %365 = arith.addf %359, %364 : vector<16x16xf32>
      %c57 = arith.constant 57 : index
      %366 = memref.load %arg3[%c57] : memref<98xf32, #tpu.memory_space<smem>>
      %c1_196 = arith.constant 1 : index
      %c1_197 = arith.constant 1 : index
      %c1_198 = arith.constant 1 : index
      %367 = vector.load %arg7[%c1_196, %c1_197, %c1_198] : memref<2x22x22xf32, #tpu.memory_space<vmem>>, vector<1x16x16xf32>
      %368 = vector.shape_cast %367 : vector<1x16x16xf32> to vector<16x16xf32>
      %369 = vector.broadcast %366 : f32 to vector<16x16xf32>
      %370 = arith.mulf %369, %368 : vector<16x16xf32>
      %371 = arith.addf %365, %370 : vector<16x16xf32>
      %c58 = arith.constant 58 : index
      %372 = memref.load %arg3[%c58] : memref<98xf32, #tpu.memory_space<smem>>
      %c1_199 = arith.constant 1 : index
      %c1_200 = arith.constant 1 : index
      %c2_201 = arith.constant 2 : index
      %373 = vector.load %arg7[%c1_199, %c1_200, %c2_201] : memref<2x22x22xf32, #tpu.memory_space<vmem>>, vector<1x16x16xf32>
      %374 = vector.shape_cast %373 : vector<1x16x16xf32> to vector<16x16xf32>
      %375 = vector.broadcast %372 : f32 to vector<16x16xf32>
      %376 = arith.mulf %375, %374 : vector<16x16xf32>
      %377 = arith.addf %371, %376 : vector<16x16xf32>
      %c59 = arith.constant 59 : index
      %378 = memref.load %arg3[%c59] : memref<98xf32, #tpu.memory_space<smem>>
      %c1_202 = arith.constant 1 : index
      %c1_203 = arith.constant 1 : index
      %c3_204 = arith.constant 3 : index
      %379 = vector.load %arg7[%c1_202, %c1_203, %c3_204] : memref<2x22x22xf32, #tpu.memory_space<vmem>>, vector<1x16x16xf32>
      %380 = vector.shape_cast %379 : vector<1x16x16xf32> to vector<16x16xf32>
      %381 = vector.broadcast %378 : f32 to vector<16x16xf32>
      %382 = arith.mulf %381, %380 : vector<16x16xf32>
      %383 = arith.addf %377, %382 : vector<16x16xf32>
      %c60 = arith.constant 60 : index
      %384 = memref.load %arg3[%c60] : memref<98xf32, #tpu.memory_space<smem>>
      %c1_205 = arith.constant 1 : index
      %c1_206 = arith.constant 1 : index
      %c4_207 = arith.constant 4 : index
      %385 = vector.load %arg7[%c1_205, %c1_206, %c4_207] : memref<2x22x22xf32, #tpu.memory_space<vmem>>, vector<1x16x16xf32>
      %386 = vector.shape_cast %385 : vector<1x16x16xf32> to vector<16x16xf32>
      %387 = vector.broadcast %384 : f32 to vector<16x16xf32>
      %388 = arith.mulf %387, %386 : vector<16x16xf32>
      %389 = arith.addf %383, %388 : vector<16x16xf32>
      %c61 = arith.constant 61 : index
      %390 = memref.load %arg3[%c61] : memref<98xf32, #tpu.memory_space<smem>>
      %c1_208 = arith.constant 1 : index
      %c1_209 = arith.constant 1 : index
      %c5_210 = arith.constant 5 : index
      %391 = vector.load %arg7[%c1_208, %c1_209, %c5_210] : memref<2x22x22xf32, #tpu.memory_space<vmem>>, vector<1x16x16xf32>
      %392 = vector.shape_cast %391 : vector<1x16x16xf32> to vector<16x16xf32>
      %393 = vector.broadcast %390 : f32 to vector<16x16xf32>
      %394 = arith.mulf %393, %392 : vector<16x16xf32>
      %395 = arith.addf %389, %394 : vector<16x16xf32>
      %c62 = arith.constant 62 : index
      %396 = memref.load %arg3[%c62] : memref<98xf32, #tpu.memory_space<smem>>
      %c1_211 = arith.constant 1 : index
      %c1_212 = arith.constant 1 : index
      %c6_213 = arith.constant 6 : index
      %397 = vector.load %arg7[%c1_211, %c1_212, %c6_213] : memref<2x22x22xf32, #tpu.memory_space<vmem>>, vector<1x16x16xf32>
      %398 = vector.shape_cast %397 : vector<1x16x16xf32> to vector<16x16xf32>
      %399 = vector.broadcast %396 : f32 to vector<16x16xf32>
      %400 = arith.mulf %399, %398 : vector<16x16xf32>
      %401 = arith.addf %395, %400 : vector<16x16xf32>
      %c63 = arith.constant 63 : index
      %402 = memref.load %arg3[%c63] : memref<98xf32, #tpu.memory_space<smem>>
      %c1_214 = arith.constant 1 : index
      %c2_215 = arith.constant 2 : index
      %c0_216 = arith.constant 0 : index
      %403 = vector.load %arg7[%c1_214, %c2_215, %c0_216] : memref<2x22x22xf32, #tpu.memory_space<vmem>>, vector<1x16x16xf32>
      %404 = vector.shape_cast %403 : vector<1x16x16xf32> to vector<16x16xf32>
      %405 = vector.broadcast %402 : f32 to vector<16x16xf32>
      %406 = arith.mulf %405, %404 : vector<16x16xf32>
      %407 = arith.addf %401, %406 : vector<16x16xf32>
      %c64 = arith.constant 64 : index
      %408 = memref.load %arg3[%c64] : memref<98xf32, #tpu.memory_space<smem>>
      %c1_217 = arith.constant 1 : index
      %c2_218 = arith.constant 2 : index
      %c1_219 = arith.constant 1 : index
      %409 = vector.load %arg7[%c1_217, %c2_218, %c1_219] : memref<2x22x22xf32, #tpu.memory_space<vmem>>, vector<1x16x16xf32>
      %410 = vector.shape_cast %409 : vector<1x16x16xf32> to vector<16x16xf32>
      %411 = vector.broadcast %408 : f32 to vector<16x16xf32>
      %412 = arith.mulf %411, %410 : vector<16x16xf32>
      %413 = arith.addf %407, %412 : vector<16x16xf32>
      %c65 = arith.constant 65 : index
      %414 = memref.load %arg3[%c65] : memref<98xf32, #tpu.memory_space<smem>>
      %c1_220 = arith.constant 1 : index
      %c2_221 = arith.constant 2 : index
      %c2_222 = arith.constant 2 : index
      %415 = vector.load %arg7[%c1_220, %c2_221, %c2_222] : memref<2x22x22xf32, #tpu.memory_space<vmem>>, vector<1x16x16xf32>
      %416 = vector.shape_cast %415 : vector<1x16x16xf32> to vector<16x16xf32>
      %417 = vector.broadcast %414 : f32 to vector<16x16xf32>
      %418 = arith.mulf %417, %416 : vector<16x16xf32>
      %419 = arith.addf %413, %418 : vector<16x16xf32>
      %c66 = arith.constant 66 : index
      %420 = memref.load %arg3[%c66] : memref<98xf32, #tpu.memory_space<smem>>
      %c1_223 = arith.constant 1 : index
      %c2_224 = arith.constant 2 : index
      %c3_225 = arith.constant 3 : index
      %421 = vector.load %arg7[%c1_223, %c2_224, %c3_225] : memref<2x22x22xf32, #tpu.memory_space<vmem>>, vector<1x16x16xf32>
      %422 = vector.shape_cast %421 : vector<1x16x16xf32> to vector<16x16xf32>
      %423 = vector.broadcast %420 : f32 to vector<16x16xf32>
      %424 = arith.mulf %423, %422 : vector<16x16xf32>
      %425 = arith.addf %419, %424 : vector<16x16xf32>
      %c67 = arith.constant 67 : index
      %426 = memref.load %arg3[%c67] : memref<98xf32, #tpu.memory_space<smem>>
      %c1_226 = arith.constant 1 : index
      %c2_227 = arith.constant 2 : index
      %c4_228 = arith.constant 4 : index
      %427 = vector.load %arg7[%c1_226, %c2_227, %c4_228] : memref<2x22x22xf32, #tpu.memory_space<vmem>>, vector<1x16x16xf32>
      %428 = vector.shape_cast %427 : vector<1x16x16xf32> to vector<16x16xf32>
      %429 = vector.broadcast %426 : f32 to vector<16x16xf32>
      %430 = arith.mulf %429, %428 : vector<16x16xf32>
      %431 = arith.addf %425, %430 : vector<16x16xf32>
      %c68 = arith.constant 68 : index
      %432 = memref.load %arg3[%c68] : memref<98xf32, #tpu.memory_space<smem>>
      %c1_229 = arith.constant 1 : index
      %c2_230 = arith.constant 2 : index
      %c5_231 = arith.constant 5 : index
      %433 = vector.load %arg7[%c1_229, %c2_230, %c5_231] : memref<2x22x22xf32, #tpu.memory_space<vmem>>, vector<1x16x16xf32>
      %434 = vector.shape_cast %433 : vector<1x16x16xf32> to vector<16x16xf32>
      %435 = vector.broadcast %432 : f32 to vector<16x16xf32>
      %436 = arith.mulf %435, %434 : vector<16x16xf32>
      %437 = arith.addf %431, %436 : vector<16x16xf32>
      %c69 = arith.constant 69 : index
      %438 = memref.load %arg3[%c69] : memref<98xf32, #tpu.memory_space<smem>>
      %c1_232 = arith.constant 1 : index
      %c2_233 = arith.constant 2 : index
      %c6_234 = arith.constant 6 : index
      %439 = vector.load %arg7[%c1_232, %c2_233, %c6_234] : memref<2x22x22xf32, #tpu.memory_space<vmem>>, vector<1x16x16xf32>
      %440 = vector.shape_cast %439 : vector<1x16x16xf32> to vector<16x16xf32>
      %441 = vector.broadcast %438 : f32 to vector<16x16xf32>
      %442 = arith.mulf %441, %440 : vector<16x16xf32>
      %443 = arith.addf %437, %442 : vector<16x16xf32>
      %c70 = arith.constant 70 : index
      %444 = memref.load %arg3[%c70] : memref<98xf32, #tpu.memory_space<smem>>
      %c1_235 = arith.constant 1 : index
      %c3_236 = arith.constant 3 : index
      %c0_237 = arith.constant 0 : index
      %445 = vector.load %arg7[%c1_235, %c3_236, %c0_237] : memref<2x22x22xf32, #tpu.memory_space<vmem>>, vector<1x16x16xf32>
      %446 = vector.shape_cast %445 : vector<1x16x16xf32> to vector<16x16xf32>
      %447 = vector.broadcast %444 : f32 to vector<16x16xf32>
      %448 = arith.mulf %447, %446 : vector<16x16xf32>
      %449 = arith.addf %443, %448 : vector<16x16xf32>
      %c71 = arith.constant 71 : index
      %450 = memref.load %arg3[%c71] : memref<98xf32, #tpu.memory_space<smem>>
      %c1_238 = arith.constant 1 : index
      %c3_239 = arith.constant 3 : index
      %c1_240 = arith.constant 1 : index
      %451 = vector.load %arg7[%c1_238, %c3_239, %c1_240] : memref<2x22x22xf32, #tpu.memory_space<vmem>>, vector<1x16x16xf32>
      %452 = vector.shape_cast %451 : vector<1x16x16xf32> to vector<16x16xf32>
      %453 = vector.broadcast %450 : f32 to vector<16x16xf32>
      %454 = arith.mulf %453, %452 : vector<16x16xf32>
      %455 = arith.addf %449, %454 : vector<16x16xf32>
      %c72 = arith.constant 72 : index
      %456 = memref.load %arg3[%c72] : memref<98xf32, #tpu.memory_space<smem>>
      %c1_241 = arith.constant 1 : index
      %c3_242 = arith.constant 3 : index
      %c2_243 = arith.constant 2 : index
      %457 = vector.load %arg7[%c1_241, %c3_242, %c2_243] : memref<2x22x22xf32, #tpu.memory_space<vmem>>, vector<1x16x16xf32>
      %458 = vector.shape_cast %457 : vector<1x16x16xf32> to vector<16x16xf32>
      %459 = vector.broadcast %456 : f32 to vector<16x16xf32>
      %460 = arith.mulf %459, %458 : vector<16x16xf32>
      %461 = arith.addf %455, %460 : vector<16x16xf32>
      %c73 = arith.constant 73 : index
      %462 = memref.load %arg3[%c73] : memref<98xf32, #tpu.memory_space<smem>>
      %c1_244 = arith.constant 1 : index
      %c3_245 = arith.constant 3 : index
      %c3_246 = arith.constant 3 : index
      %463 = vector.load %arg7[%c1_244, %c3_245, %c3_246] : memref<2x22x22xf32, #tpu.memory_space<vmem>>, vector<1x16x16xf32>
      %464 = vector.shape_cast %463 : vector<1x16x16xf32> to vector<16x16xf32>
      %465 = vector.broadcast %462 : f32 to vector<16x16xf32>
      %466 = arith.mulf %465, %464 : vector<16x16xf32>
      %467 = arith.addf %461, %466 : vector<16x16xf32>
      %c74 = arith.constant 74 : index
      %468 = memref.load %arg3[%c74] : memref<98xf32, #tpu.memory_space<smem>>
      %c1_247 = arith.constant 1 : index
      %c3_248 = arith.constant 3 : index
      %c4_249 = arith.constant 4 : index
      %469 = vector.load %arg7[%c1_247, %c3_248, %c4_249] : memref<2x22x22xf32, #tpu.memory_space<vmem>>, vector<1x16x16xf32>
      %470 = vector.shape_cast %469 : vector<1x16x16xf32> to vector<16x16xf32>
      %471 = vector.broadcast %468 : f32 to vector<16x16xf32>
      %472 = arith.mulf %471, %470 : vector<16x16xf32>
      %473 = arith.addf %467, %472 : vector<16x16xf32>
      %c75 = arith.constant 75 : index
      %474 = memref.load %arg3[%c75] : memref<98xf32, #tpu.memory_space<smem>>
      %c1_250 = arith.constant 1 : index
      %c3_251 = arith.constant 3 : index
      %c5_252 = arith.constant 5 : index
      %475 = vector.load %arg7[%c1_250, %c3_251, %c5_252] : memref<2x22x22xf32, #tpu.memory_space<vmem>>, vector<1x16x16xf32>
      %476 = vector.shape_cast %475 : vector<1x16x16xf32> to vector<16x16xf32>
      %477 = vector.broadcast %474 : f32 to vector<16x16xf32>
      %478 = arith.mulf %477, %476 : vector<16x16xf32>
      %479 = arith.addf %473, %478 : vector<16x16xf32>
      %c76 = arith.constant 76 : index
      %480 = memref.load %arg3[%c76] : memref<98xf32, #tpu.memory_space<smem>>
      %c1_253 = arith.constant 1 : index
      %c3_254 = arith.constant 3 : index
      %c6_255 = arith.constant 6 : index
      %481 = vector.load %arg7[%c1_253, %c3_254, %c6_255] : memref<2x22x22xf32, #tpu.memory_space<vmem>>, vector<1x16x16xf32>
      %482 = vector.shape_cast %481 : vector<1x16x16xf32> to vector<16x16xf32>
      %483 = vector.broadcast %480 : f32 to vector<16x16xf32>
      %484 = arith.mulf %483, %482 : vector<16x16xf32>
      %485 = arith.addf %479, %484 : vector<16x16xf32>
      %c77 = arith.constant 77 : index
      %486 = memref.load %arg3[%c77] : memref<98xf32, #tpu.memory_space<smem>>
      %c1_256 = arith.constant 1 : index
      %c4_257 = arith.constant 4 : index
      %c0_258 = arith.constant 0 : index
      %487 = vector.load %arg7[%c1_256, %c4_257, %c0_258] : memref<2x22x22xf32, #tpu.memory_space<vmem>>, vector<1x16x16xf32>
      %488 = vector.shape_cast %487 : vector<1x16x16xf32> to vector<16x16xf32>
      %489 = vector.broadcast %486 : f32 to vector<16x16xf32>
      %490 = arith.mulf %489, %488 : vector<16x16xf32>
      %491 = arith.addf %485, %490 : vector<16x16xf32>
      %c78 = arith.constant 78 : index
      %492 = memref.load %arg3[%c78] : memref<98xf32, #tpu.memory_space<smem>>
      %c1_259 = arith.constant 1 : index
      %c4_260 = arith.constant 4 : index
      %c1_261 = arith.constant 1 : index
      %493 = vector.load %arg7[%c1_259, %c4_260, %c1_261] : memref<2x22x22xf32, #tpu.memory_space<vmem>>, vector<1x16x16xf32>
      %494 = vector.shape_cast %493 : vector<1x16x16xf32> to vector<16x16xf32>
      %495 = vector.broadcast %492 : f32 to vector<16x16xf32>
      %496 = arith.mulf %495, %494 : vector<16x16xf32>
      %497 = arith.addf %491, %496 : vector<16x16xf32>
      %c79 = arith.constant 79 : index
      %498 = memref.load %arg3[%c79] : memref<98xf32, #tpu.memory_space<smem>>
      %c1_262 = arith.constant 1 : index
      %c4_263 = arith.constant 4 : index
      %c2_264 = arith.constant 2 : index
      %499 = vector.load %arg7[%c1_262, %c4_263, %c2_264] : memref<2x22x22xf32, #tpu.memory_space<vmem>>, vector<1x16x16xf32>
      %500 = vector.shape_cast %499 : vector<1x16x16xf32> to vector<16x16xf32>
      %501 = vector.broadcast %498 : f32 to vector<16x16xf32>
      %502 = arith.mulf %501, %500 : vector<16x16xf32>
      %503 = arith.addf %497, %502 : vector<16x16xf32>
      %c80 = arith.constant 80 : index
      %504 = memref.load %arg3[%c80] : memref<98xf32, #tpu.memory_space<smem>>
      %c1_265 = arith.constant 1 : index
      %c4_266 = arith.constant 4 : index
      %c3_267 = arith.constant 3 : index
      %505 = vector.load %arg7[%c1_265, %c4_266, %c3_267] : memref<2x22x22xf32, #tpu.memory_space<vmem>>, vector<1x16x16xf32>
      %506 = vector.shape_cast %505 : vector<1x16x16xf32> to vector<16x16xf32>
      %507 = vector.broadcast %504 : f32 to vector<16x16xf32>
      %508 = arith.mulf %507, %506 : vector<16x16xf32>
      %509 = arith.addf %503, %508 : vector<16x16xf32>
      %c81 = arith.constant 81 : index
      %510 = memref.load %arg3[%c81] : memref<98xf32, #tpu.memory_space<smem>>
      %c1_268 = arith.constant 1 : index
      %c4_269 = arith.constant 4 : index
      %c4_270 = arith.constant 4 : index
      %511 = vector.load %arg7[%c1_268, %c4_269, %c4_270] : memref<2x22x22xf32, #tpu.memory_space<vmem>>, vector<1x16x16xf32>
      %512 = vector.shape_cast %511 : vector<1x16x16xf32> to vector<16x16xf32>
      %513 = vector.broadcast %510 : f32 to vector<16x16xf32>
      %514 = arith.mulf %513, %512 : vector<16x16xf32>
      %515 = arith.addf %509, %514 : vector<16x16xf32>
      %c82 = arith.constant 82 : index
      %516 = memref.load %arg3[%c82] : memref<98xf32, #tpu.memory_space<smem>>
      %c1_271 = arith.constant 1 : index
      %c4_272 = arith.constant 4 : index
      %c5_273 = arith.constant 5 : index
      %517 = vector.load %arg7[%c1_271, %c4_272, %c5_273] : memref<2x22x22xf32, #tpu.memory_space<vmem>>, vector<1x16x16xf32>
      %518 = vector.shape_cast %517 : vector<1x16x16xf32> to vector<16x16xf32>
      %519 = vector.broadcast %516 : f32 to vector<16x16xf32>
      %520 = arith.mulf %519, %518 : vector<16x16xf32>
      %521 = arith.addf %515, %520 : vector<16x16xf32>
      %c83 = arith.constant 83 : index
      %522 = memref.load %arg3[%c83] : memref<98xf32, #tpu.memory_space<smem>>
      %c1_274 = arith.constant 1 : index
      %c4_275 = arith.constant 4 : index
      %c6_276 = arith.constant 6 : index
      %523 = vector.load %arg7[%c1_274, %c4_275, %c6_276] : memref<2x22x22xf32, #tpu.memory_space<vmem>>, vector<1x16x16xf32>
      %524 = vector.shape_cast %523 : vector<1x16x16xf32> to vector<16x16xf32>
      %525 = vector.broadcast %522 : f32 to vector<16x16xf32>
      %526 = arith.mulf %525, %524 : vector<16x16xf32>
      %527 = arith.addf %521, %526 : vector<16x16xf32>
      %c84 = arith.constant 84 : index
      %528 = memref.load %arg3[%c84] : memref<98xf32, #tpu.memory_space<smem>>
      %c1_277 = arith.constant 1 : index
      %c5_278 = arith.constant 5 : index
      %c0_279 = arith.constant 0 : index
      %529 = vector.load %arg7[%c1_277, %c5_278, %c0_279] : memref<2x22x22xf32, #tpu.memory_space<vmem>>, vector<1x16x16xf32>
      %530 = vector.shape_cast %529 : vector<1x16x16xf32> to vector<16x16xf32>
      %531 = vector.broadcast %528 : f32 to vector<16x16xf32>
      %532 = arith.mulf %531, %530 : vector<16x16xf32>
      %533 = arith.addf %527, %532 : vector<16x16xf32>
      %c85 = arith.constant 85 : index
      %534 = memref.load %arg3[%c85] : memref<98xf32, #tpu.memory_space<smem>>
      %c1_280 = arith.constant 1 : index
      %c5_281 = arith.constant 5 : index
      %c1_282 = arith.constant 1 : index
      %535 = vector.load %arg7[%c1_280, %c5_281, %c1_282] : memref<2x22x22xf32, #tpu.memory_space<vmem>>, vector<1x16x16xf32>
      %536 = vector.shape_cast %535 : vector<1x16x16xf32> to vector<16x16xf32>
      %537 = vector.broadcast %534 : f32 to vector<16x16xf32>
      %538 = arith.mulf %537, %536 : vector<16x16xf32>
      %539 = arith.addf %533, %538 : vector<16x16xf32>
      %c86 = arith.constant 86 : index
      %540 = memref.load %arg3[%c86] : memref<98xf32, #tpu.memory_space<smem>>
      %c1_283 = arith.constant 1 : index
      %c5_284 = arith.constant 5 : index
      %c2_285 = arith.constant 2 : index
      %541 = vector.load %arg7[%c1_283, %c5_284, %c2_285] : memref<2x22x22xf32, #tpu.memory_space<vmem>>, vector<1x16x16xf32>
      %542 = vector.shape_cast %541 : vector<1x16x16xf32> to vector<16x16xf32>
      %543 = vector.broadcast %540 : f32 to vector<16x16xf32>
      %544 = arith.mulf %543, %542 : vector<16x16xf32>
      %545 = arith.addf %539, %544 : vector<16x16xf32>
      %c87 = arith.constant 87 : index
      %546 = memref.load %arg3[%c87] : memref<98xf32, #tpu.memory_space<smem>>
      %c1_286 = arith.constant 1 : index
      %c5_287 = arith.constant 5 : index
      %c3_288 = arith.constant 3 : index
      %547 = vector.load %arg7[%c1_286, %c5_287, %c3_288] : memref<2x22x22xf32, #tpu.memory_space<vmem>>, vector<1x16x16xf32>
      %548 = vector.shape_cast %547 : vector<1x16x16xf32> to vector<16x16xf32>
      %549 = vector.broadcast %546 : f32 to vector<16x16xf32>
      %550 = arith.mulf %549, %548 : vector<16x16xf32>
      %551 = arith.addf %545, %550 : vector<16x16xf32>
      %c88 = arith.constant 88 : index
      %552 = memref.load %arg3[%c88] : memref<98xf32, #tpu.memory_space<smem>>
      %c1_289 = arith.constant 1 : index
      %c5_290 = arith.constant 5 : index
      %c4_291 = arith.constant 4 : index
      %553 = vector.load %arg7[%c1_289, %c5_290, %c4_291] : memref<2x22x22xf32, #tpu.memory_space<vmem>>, vector<1x16x16xf32>
      %554 = vector.shape_cast %553 : vector<1x16x16xf32> to vector<16x16xf32>
      %555 = vector.broadcast %552 : f32 to vector<16x16xf32>
      %556 = arith.mulf %555, %554 : vector<16x16xf32>
      %557 = arith.addf %551, %556 : vector<16x16xf32>
      %c89 = arith.constant 89 : index
      %558 = memref.load %arg3[%c89] : memref<98xf32, #tpu.memory_space<smem>>
      %c1_292 = arith.constant 1 : index
      %c5_293 = arith.constant 5 : index
      %c5_294 = arith.constant 5 : index
      %559 = vector.load %arg7[%c1_292, %c5_293, %c5_294] : memref<2x22x22xf32, #tpu.memory_space<vmem>>, vector<1x16x16xf32>
      %560 = vector.shape_cast %559 : vector<1x16x16xf32> to vector<16x16xf32>
      %561 = vector.broadcast %558 : f32 to vector<16x16xf32>
      %562 = arith.mulf %561, %560 : vector<16x16xf32>
      %563 = arith.addf %557, %562 : vector<16x16xf32>
      %c90 = arith.constant 90 : index
      %564 = memref.load %arg3[%c90] : memref<98xf32, #tpu.memory_space<smem>>
      %c1_295 = arith.constant 1 : index
      %c5_296 = arith.constant 5 : index
      %c6_297 = arith.constant 6 : index
      %565 = vector.load %arg7[%c1_295, %c5_296, %c6_297] : memref<2x22x22xf32, #tpu.memory_space<vmem>>, vector<1x16x16xf32>
      %566 = vector.shape_cast %565 : vector<1x16x16xf32> to vector<16x16xf32>
      %567 = vector.broadcast %564 : f32 to vector<16x16xf32>
      %568 = arith.mulf %567, %566 : vector<16x16xf32>
      %569 = arith.addf %563, %568 : vector<16x16xf32>
      %c91 = arith.constant 91 : index
      %570 = memref.load %arg3[%c91] : memref<98xf32, #tpu.memory_space<smem>>
      %c1_298 = arith.constant 1 : index
      %c6_299 = arith.constant 6 : index
      %c0_300 = arith.constant 0 : index
      %571 = vector.load %arg7[%c1_298, %c6_299, %c0_300] : memref<2x22x22xf32, #tpu.memory_space<vmem>>, vector<1x16x16xf32>
      %572 = vector.shape_cast %571 : vector<1x16x16xf32> to vector<16x16xf32>
      %573 = vector.broadcast %570 : f32 to vector<16x16xf32>
      %574 = arith.mulf %573, %572 : vector<16x16xf32>
      %575 = arith.addf %569, %574 : vector<16x16xf32>
      %c92 = arith.constant 92 : index
      %576 = memref.load %arg3[%c92] : memref<98xf32, #tpu.memory_space<smem>>
      %c1_301 = arith.constant 1 : index
      %c6_302 = arith.constant 6 : index
      %c1_303 = arith.constant 1 : index
      %577 = vector.load %arg7[%c1_301, %c6_302, %c1_303] : memref<2x22x22xf32, #tpu.memory_space<vmem>>, vector<1x16x16xf32>
      %578 = vector.shape_cast %577 : vector<1x16x16xf32> to vector<16x16xf32>
      %579 = vector.broadcast %576 : f32 to vector<16x16xf32>
      %580 = arith.mulf %579, %578 : vector<16x16xf32>
      %581 = arith.addf %575, %580 : vector<16x16xf32>
      %c93 = arith.constant 93 : index
      %582 = memref.load %arg3[%c93] : memref<98xf32, #tpu.memory_space<smem>>
      %c1_304 = arith.constant 1 : index
      %c6_305 = arith.constant 6 : index
      %c2_306 = arith.constant 2 : index
      %583 = vector.load %arg7[%c1_304, %c6_305, %c2_306] : memref<2x22x22xf32, #tpu.memory_space<vmem>>, vector<1x16x16xf32>
      %584 = vector.shape_cast %583 : vector<1x16x16xf32> to vector<16x16xf32>
      %585 = vector.broadcast %582 : f32 to vector<16x16xf32>
      %586 = arith.mulf %585, %584 : vector<16x16xf32>
      %587 = arith.addf %581, %586 : vector<16x16xf32>
      %c94 = arith.constant 94 : index
      %588 = memref.load %arg3[%c94] : memref<98xf32, #tpu.memory_space<smem>>
      %c1_307 = arith.constant 1 : index
      %c6_308 = arith.constant 6 : index
      %c3_309 = arith.constant 3 : index
      %589 = vector.load %arg7[%c1_307, %c6_308, %c3_309] : memref<2x22x22xf32, #tpu.memory_space<vmem>>, vector<1x16x16xf32>
      %590 = vector.shape_cast %589 : vector<1x16x16xf32> to vector<16x16xf32>
      %591 = vector.broadcast %588 : f32 to vector<16x16xf32>
      %592 = arith.mulf %591, %590 : vector<16x16xf32>
      %593 = arith.addf %587, %592 : vector<16x16xf32>
      %c95 = arith.constant 95 : index
      %594 = memref.load %arg3[%c95] : memref<98xf32, #tpu.memory_space<smem>>
      %c1_310 = arith.constant 1 : index
      %c6_311 = arith.constant 6 : index
      %c4_312 = arith.constant 4 : index
      %595 = vector.load %arg7[%c1_310, %c6_311, %c4_312] : memref<2x22x22xf32, #tpu.memory_space<vmem>>, vector<1x16x16xf32>
      %596 = vector.shape_cast %595 : vector<1x16x16xf32> to vector<16x16xf32>
      %597 = vector.broadcast %594 : f32 to vector<16x16xf32>
      %598 = arith.mulf %597, %596 : vector<16x16xf32>
      %599 = arith.addf %593, %598 : vector<16x16xf32>
      %c96 = arith.constant 96 : index
      %600 = memref.load %arg3[%c96] : memref<98xf32, #tpu.memory_space<smem>>
      %c1_313 = arith.constant 1 : index
      %c6_314 = arith.constant 6 : index
      %c5_315 = arith.constant 5 : index
      %601 = vector.load %arg7[%c1_313, %c6_314, %c5_315] : memref<2x22x22xf32, #tpu.memory_space<vmem>>, vector<1x16x16xf32>
      %602 = vector.shape_cast %601 : vector<1x16x16xf32> to vector<16x16xf32>
      %603 = vector.broadcast %600 : f32 to vector<16x16xf32>
      %604 = arith.mulf %603, %602 : vector<16x16xf32>
      %605 = arith.addf %599, %604 : vector<16x16xf32>
      %c97 = arith.constant 97 : index
      %606 = memref.load %arg3[%c97] : memref<98xf32, #tpu.memory_space<smem>>
      %c1_316 = arith.constant 1 : index
      %c6_317 = arith.constant 6 : index
      %c6_318 = arith.constant 6 : index
      %607 = vector.load %arg7[%c1_316, %c6_317, %c6_318] : memref<2x22x22xf32, #tpu.memory_space<vmem>>, vector<1x16x16xf32>
      %608 = vector.shape_cast %607 : vector<1x16x16xf32> to vector<16x16xf32>
      %609 = vector.broadcast %606 : f32 to vector<16x16xf32>
      %610 = arith.mulf %609, %608 : vector<16x16xf32>
      %611 = arith.addf %605, %610 : vector<16x16xf32>
      %612 = arith.negf %611 : vector<16x16xf32>
      %613 = math.exp %612 : vector<16x16xf32>
      %cst_319 = arith.constant 1.000000e+00 : f32
      %614 = vector.broadcast %cst_319 : f32 to vector<16x16xf32>
      %615 = arith.addf %614, %613 : vector<16x16xf32>
      %616 = arith.divf %614, %615 : vector<16x16xf32>
      %c0_320 = arith.constant 0 : index
      %c0_321 = arith.constant 0 : index
      %c0_322 = arith.constant 0 : index
      %c0_323 = arith.constant 0 : index
      %617 = vector.load %arg4[%c0_320, %c0_321, %c0_322, %c0_323] : memref<1x1x16x16xf32, #tpu.memory_space<vmem>>, vector<1x1x16x16xf32>
      %618 = vector.shape_cast %617 : vector<1x1x16x16xf32> to vector<16x16xf32>
      %619 = vector.shape_cast %616 : vector<16x16xf32> to vector<1x1x16x16xf32>
      tpu.vector_store %arg4[%c0_320, %c0_321, %c0_322, %c0_323], %619 {strides = array<i32>} : memref<1x1x16x16xf32, #tpu.memory_space<vmem>>, vector<1x1x16x16xf32>,
    } else {
    }
    return
  }
  func.func @transform_0(%arg0: i32, %arg1: i32) -> (i32, i32, i32, i32) {
    %c0_i32 = arith.constant 0 : i32
    %c0_i32_0 = arith.constant 0 : i32
    %c0_i32_1 = arith.constant 0 : i32
    return %arg0, %arg1, %c0_i32, %c0_i32_0 : i32, i32, i32, i32
  }
  func.func @transform_1(%arg0: i32, %arg1: i32) -> i32 {
    %c0_i32 = arith.constant 0 : i32
    %c0_i32_0 = arith.constant 0 : i32
    return %c0_i32 : i32
  }
  func.func @transform_2(%arg0: i32, %arg1: i32) -> (i32, i32, i32, i32) {
    %c0_i32 = arith.constant 0 : i32
    %c0_i32_0 = arith.constant 0 : i32
    %c0_i32_1 = arith.constant 0 : i32
    %c0_i32_2 = arith.constant 0 : i32
    return %arg0, %c0_i32, %c0_i32_0, %c0_i32_1 : i32, i32, i32, i32
  }
}

</mosaic_0001>

<llo_original>
// kernel: tpu_custom_call.1
$region0: #{tpu_custom_call.1}
  #allocation0 [shape = 'u32[]', space=smem, size = 0x4, offset = 0x4, fixed_abs, tag = 'smem constant byte address 0x4 - core index']
  #allocation1 [shape = 'u32[144,128]{1,0:T(1,128)}', space=vmem, size = 0x12000, scoped, tag = 'internal scratch']
  #allocation2 [shape = 'f32[16,16]{1,0:T(8,128)}', space=vmem, size = 0x2000, scoped, tag = 'scratch operand']
  #allocation3 [shape = 'f32[16,16]{1,0:T(8,128)}', space=vmem, size = 0x2000, scoped, tag = 'scratch operand']
  #allocation4 [shape = 'f32[2,22,22]{2,1,0:T(8,128)}', space=vmem, size = 0x6000, scoped, tag = 'scratch operand']
  %s0 = inlined_call_operand.hbm [shape: f32[2,4,16,16], index: 0, kind: input, shape index: {}]
  %s1 = inlined_call_operand.vmem [shape: f32[98], index: 1, kind: input, shape index: {}]
  %s2 = inlined_call_operand.hbm [shape: f32[2,1,16,16], index: 2, kind: output, shape index: {}]
  %s3 = sld [smem:[#allocation0]]
  $region61: #{tpu_custom_call.1} parent=0
    _
  %s5 = ssub.s32 1, %s3
  %s6 = scalar_select 0, %s5, %s3
  $region1: #{tpu_custom_call.1} parent=0
    #allocation5 [shape = 'u8[65536]{0}', space=vmem, size = 0x10000, scoped, tag = 'input window, operand 0']
    #allocation6 [shape = 's32[2]{0}', space=sflag, size = 0x8, scoped, tag = 'scoped memory for tpu_custom_call.1']
    #allocation7 [shape = 's32[2]{0}', space=sflag, size = 0x8, scoped, tag = 'scoped memory for tpu_custom_call.1']
    #allocation8 [shape = 's32[2]{0}', space=sflag, size = 0x8, scoped, tag = 'scoped memory for tpu_custom_call.1']
    #allocation9 [shape = 'u8[512]{0}', space=smem, size = 0x200, scoped, tag = 'input window, operand 1, single buffered']
    #allocation10 [shape = 'u8[16384]{0}', space=vmem, size = 0x4000, scoped, tag = 'output window, operand 0']
    %7 = vsyncpa [#allocation6], 0
    %s8 = scalar_lea.sflag [#allocation6], 1
    %9 = vsyncpa %s8, 0
    %10 = vsyncpa [#allocation8], 0
    %11 = vsyncpa [#allocation7], 0
    %s12 = scalar_lea.sflag [#allocation7], 1
    %13 = vsyncpa %s12, 0
    loop: start=0, step=1, limit=4
    $region2: #{tpu_custom_call.1} parent=1 // loop_pre_header
      _
    $region3: #{tpu_custom_call.1} parent=1 // loop_header
      %s15 = sphi 0, %s19
      %p16 = scmp.ge.s32.totalorder %s15, 4
      %s22 = sphi 0, %s34
      %s23 = sphi 0, %s30
      %s24 = sphi 0, %s22
      %s25 = sphi 0, %s23
      %s26 = sphi 0, %s24
      %s27 = sphi 0, %s25
      %s39 = sphi 0, %s41
      %s42 = sphi 0, %s39
      %s43 = sphi 0, %s42
      %s59 = sphi 0, %s43
      %s63 = sphi 0, %s63
      %s65 = sphi 0, %s63
      %s66 = sphi 0, %s65
      %s80 = sphi 0, %s66
      %s86 = sphi 0, %s88
      %s89 = sphi 0, %s86
      %s90 = sphi 0, %s89
      %s106 = sphi 0, %s90
    $region4: #{tpu_custom_call.1} parent=1 // loop_header_branch
      %18 = sbr.rel (%p16) target = $region8
    $region5: #{tpu_custom_call.1} parent=1 // loop_body
      %s20 = ssub.s32 %s15, 1
      %s21 = ssub.s32 %s15, 2
      %s28 = sadd.s32 1, %s23
      %p29 = scmp.ge.s32.totalorder %s28, 1
      %s30 = scalar_select %p29, 0, %s28
      %s31 = sadd.s32 1, %s22
      %s32 = scalar_select %p29, %s31, %s22
      %p33 = scmp.ge.s32.totalorder %s32, 2
      %s34 = scalar_select %p33, 0, %s32
      %s35 = ssub.s32 %s22, %s34
      %s36 = ssub.s32 %s23, %s30
      %s37 = sor.u32 %s35, %s36
      %p38 = scmp.eq.s32.totalorder %s37, 0
      %s40 = sadd.s32 %s39, 1
      %s41 = scalar_select %p38, %s39, %s40
      %p44 = pneg %p38
      %p45 = scmp.eq.s32.totalorder %s15, 1
      %p46 = por %p44, %p45
      %p47 = scmp.ne.s32.totalorder %s39, %s42
      %p48 = scmp.eq.s32.totalorder %s15, 0
      %p49 = por %p47, %p48
      %p50 = scmp.ne.s32.totalorder %s39, %s42
      %p51 = scmp.eq.s32.totalorder %s20, 1
      %p52 = por %p50, %p51
      %p53 = scmp.ne.s32.totalorder %s42, %s43
      %p54 = scmp.eq.s32.totalorder %s20, 0
      %p55 = por %p53, %p54
      %p56 = scmp.ne.s32.totalorder %s42, %s43
      %p57 = scmp.eq.s32.totalorder %s21, 1
      %p58 = por %p56, %p57
      %p60 = scmp.ne.s32.totalorder %s43, %s59
      %p61 = scmp.eq.s32.totalorder %s21, 0
      %p62 = por %p60, %p61
      %s64 = sadd.s32 %s63, 1
      %p67 = scmp.eq.s32.totalorder %s15, 1
      %p68 = scmp.ne.s32.totalorder %s63, %s65
      %p69 = scmp.eq.s32.totalorder %s15, 0
      %p70 = por %p68, %p69
      %p71 = scmp.ne.s32.totalorder %s63, %s65
      %p72 = scmp.eq.s32.totalorder %s20, 1
      %p73 = por %p71, %p72
      %p74 = scmp.ne.s32.totalorder %s65, %s66
      %p75 = scmp.eq.s32.totalorder %s20, 0
      %p76 = por %p74, %p75
      %p77 = scmp.ne.s32.totalorder %s65, %s66
      %p78 = scmp.eq.s32.totalorder %s21, 1
      %p79 = por %p77, %p78
      %p81 = scmp.ne.s32.totalorder %s66, %s80
      %p82 = scmp.eq.s32.totalorder %s21, 0
      %p83 = por %p81, %p82
      %s84 = ssub.s32 %s22, %s34
      %p85 = scmp.eq.s32.totalorder %s84, 0
      %s87 = sadd.s32 %s86, 1
      %s88 = scalar_select %p85, %s86, %s87
      %p91 = pneg %p85
      %p92 = scmp.eq.s32.totalorder %s15, 1
      %p93 = por %p91, %p92
      %p94 = scmp.ne.s32.totalorder %s86, %s89
      %p95 = scmp.eq.s32.totalorder %s15, 0
      %p96 = por %p94, %p95
      %p97 = scmp.ne.s32.totalorder %s86, %s89
      %p98 = scmp.eq.s32.totalorder %s20, 1
      %p99 = por %p97, %p98
      %p100 = scmp.ne.s32.totalorder %s89, %s90
      %p101 = scmp.eq.s32.totalorder %s20, 0
      %p102 = por %p100, %p101
      %p103 = scmp.ne.s32.totalorder %s89, %s90
      %p104 = scmp.eq.s32.totalorder %s21, 1
      %p105 = por %p103, %p104
      %p107 = scmp.ne.s32.totalorder %s90, %s106
      %p108 = scmp.eq.s32.totalorder %s21, 0
      %p109 = por %p107, %p108
      %p110 = scmp.le.s32.totalorder 1, %s15
      %p111 = scmp.lt.s32.totalorder %s15, 3
      %p112 = pnand %p110, %p111
      %p113 = pneg %p112
      // Predicated region
      $region9: #{tpu_custom_call.1} parent=5 // pred_check
        _
      $region10: #{tpu_custom_call.1} parent=5 // pred_check_branch
        %115 = sbr.rel (%p112) target = $region12
      $region11: #{tpu_custom_call.1} parent=5 // pred_region
        %s116 = ssub.s32 %s15, 1
        // Predicated region
        $region13: #{tpu_custom_call.1} parent=11 // pred_check
          %p117 = pneg %p76
        $region14: #{tpu_custom_call.1} parent=11 // pred_check_branch
          %119 = sbr.rel (%p117) target = $region16
        $region15: #{tpu_custom_call.1} parent=11 // pred_region
          %s121 = ssub.s32 16, 16
          %122 = vsyncadd [#allocation8], %s121
          %s124 = sshll.u32 %s1, 4
          %s125 = int_to_ptr.vmem [resolvable:$true] %s124
          %127 = dma.vmem_to_smem %s125, 16, [#allocation9], [#allocation8]
        $region16: #{tpu_custom_call.1} parent=11 // pred_fallthru
          _
      $region12: #{tpu_custom_call.1} parent=5 // pred_fallthru
        _
      %p128 = scmp.lt.s32.totalorder %s15, 2
      // Predicated region
      $region17: #{tpu_custom_call.1} parent=5 // pred_check
        %p129 = pneg %p128
      $region18: #{tpu_custom_call.1} parent=5 // pred_check_branch
        %131 = sbr.rel (%p129) target = $region20
      $region19: #{tpu_custom_call.1} parent=5 // pred_region
        // Predicated region
        $region21: #{tpu_custom_call.1} parent=19 // pred_check
          %p132 = pneg %p49
        $region22: #{tpu_custom_call.1} parent=19 // pred_check_branch
          %134 = sbr.rel (%p132) target = $region24
        $region23: #{tpu_custom_call.1} parent=19 // pred_region
          %s135 = sand.u32 %s39, 1
          %s136 = scalar_lea.sflag [#allocation6], %s135
          %s137 = sand.u32 %s39, 1
          %s138 = smul.addr %s137, 64
          %s139 = scalar_lea.vmem [#allocation5], %s138
          %s140 = smul.u32 4, %s23
          %s142 = ssub.s32 1024, 1024
          %143 = vsyncadd %s136, %s142
          %s144 = smul.addr %s140, 2
          %s145 = smul.addr %s22, 8
          %s146 = sadd.s32 %s144, %s145
          %s147 = smul.addr %s146, 128
          %s148 = scalar_lea.hbm %s0, %s147
          %s149 = sshll.u32 %s139, 4
          %s150 = int_to_ptr.vmem [resolvable:$true] %s149
          %155 = dma.hbm_to_vmem [thread:$0]  %s148, 1024, %s150, %s136, 128, 128, 8
        $region24: #{tpu_custom_call.1} parent=19 // pred_fallthru
          _
      $region20: #{tpu_custom_call.1} parent=5 // pred_fallthru
        _
      %p156 = scmp.le.s32.totalorder 1, %s15
      %p157 = scmp.lt.s32.totalorder %s15, 3
      %p158 = pnand %p156, %p157
      %p159 = pneg %p158
      // Predicated region
      $region25: #{tpu_custom_call.1} parent=5 // pred_check
        _
      $region26: #{tpu_custom_call.1} parent=5 // pred_check_branch
        %161 = sbr.rel (%p158) target = $region28
      $region27: #{tpu_custom_call.1} parent=5 // pred_region
        %s162 = ssub.s32 %s15, 1
        %s163 = sand.u32 %s42, 1
        %s164 = scalar_lea.sflag [#allocation6], %s163
        %s165 = sand.u32 %s42, 1
        %s166 = smul.addr %s165, 64
        %s167 = scalar_lea.vmem [#allocation5], %s166
        // Predicated region
        $region29: #{tpu_custom_call.1} parent=27 // pred_check
          %p168 = pneg %p55
        $region30: #{tpu_custom_call.1} parent=27 // pred_check_branch
          %170 = sbr.rel (%p168) target = $region32
        $region31: #{tpu_custom_call.1} parent=27 // pred_region
          %171 = dma.done %s164, 1024
        $region32: #{tpu_custom_call.1} parent=27 // pred_fallthru
          _
        // Predicated region
        $region33: #{tpu_custom_call.1} parent=27 // pred_check
          %p172 = pneg %p76
        $region34: #{tpu_custom_call.1} parent=27 // pred_check_branch
          %174 = sbr.rel (%p172) target = $region36
        $region35: #{tpu_custom_call.1} parent=27 // pred_region
          %175 = dma.done [#allocation8], 16
        $region36: #{tpu_custom_call.1} parent=27 // pred_fallthru
          _
        %176 = sfence
        %s177 = sand.u32 %s42, 1
        %s178 = scalar_lea.sflag [#allocation6], %s177
        %s179 = sand.u32 %s42, 1
        %s180 = smul.addr %s179, 64
        %s181 = scalar_lea.vmem [#allocation5], %s180
        %p182 = pneg %p55
        %p183 = pneg %p52
        %p184 = pneg %p76
        %p185 = pneg %p73
        %p186 = pneg %p102
        %p187 = pneg %p99
        %s188 = sand.u32 %s89, 1
        %s189 = scalar_lea.sflag [#allocation7], %s188
        %s190 = sand.u32 %s89, 1
        %s191 = smul.addr %s190, 16
        %s192 = scalar_lea.vmem [#allocation10], %s191
        %s193 = smul.u32 4, %s25
        %v194 = vld [vmem:[%s167] sm:$0xff]
        %v195 = vld [vmem:[%s167 + $0x8] sm:$0xff]
        %v196 = vld [vmem:[%s167 + $0x10] sm:$0xff]
        %v197 = vld [vmem:[%s167 + $0x18] sm:$0xff]
        %v198 = vld [vmem:[%s167 + $0x20] sm:$0xff]
        %v199 = vld [vmem:[%s167 + $0x28] sm:$0xff]
        %v200 = vld [vmem:[%s167 + $0x30] sm:$0xff]
        %v201 = vld [vmem:[%s167 + $0x38] sm:$0xff]
        %vm202 = vcmask 130048
        %v203 = vsel %vm202, %v194, -inf
        %v204 = vsel %vm202, %v196, -inf
        %v205 = vsel %vm202, %v198, -inf
        %v206 = vmax.f32 %v203, %v205
        %v207 = vsel %vm202, %v200, -inf
        %v208 = vmax.f32 %v204, %v207
        %v209 = vmax.f32 %v206, %v208
        %v210 = vsel %vm202, %v195, -inf
        %v211 = vsel %vm202, %v197, -inf
        %v212 = vsel %vm202, %v199, -inf
        %v213 = vmax.f32 %v210, %v212
        %v214 = vsel %vm202, %v201, -inf
        %v215 = vmax.f32 %v211, %v214
        %v216 = vmax.f32 %v213, %v215
        %v217 = vsel %vm202, %v194, 0.0
        %v218 = vsel %vm202, %v196, 0.0
        %v219 = vadd.f32 %v217, %v218
        %v220 = vsel %vm202, %v198, 0.0
        %v221 = vadd.f32 %v219, %v220
        %v222 = vsel %vm202, %v200, 0.0
        %v223 = vadd.f32 %v221, %v222
        %v224 = vsel %vm202, %v195, 0.0
        %v225 = vsel %vm202, %v197, 0.0
        %v226 = vadd.f32 %v224, %v225
        %v227 = vsel %vm202, %v199, 0.0
        %v228 = vadd.f32 %v226, %v227
        %v229 = vsel %vm202, %v201, 0.0
        %v230 = vadd.f32 %v228, %v229
        %p231 = scmp.eq.s32.totalorder %s25, 0
        // Predicated region
        $region37: #{tpu_custom_call.1} parent=27 // pred_check
          %p232 = pneg %p231
        $region38: #{tpu_custom_call.1} parent=27 // pred_check_branch
          %234 = sbr.rel (%p232) target = $region40
        $region39: #{tpu_custom_call.1} parent=27 // pred_region
          %235 = vst.msk [vmem:[#allocation2] sm:$0xff] %vm202, %v209
          %236 = vst.msk [vmem:[#allocation2 + $0x8] sm:$0xff] %vm202, %v216
          %237 = vst.msk [vmem:[#allocation3] sm:$0xff] %vm202, %v223
          %238 = vst.msk [vmem:[#allocation3 + $0x8] sm:$0xff] %vm202, %v230
        $region40: #{tpu_custom_call.1} parent=27 // pred_fallthru
          _
        %p239 = scmp.gt.s32.totalorder %s25, 0
        // Predicated region
        $region41: #{tpu_custom_call.1} parent=27 // pred_check
          %p240 = pneg %p239
        $region42: #{tpu_custom_call.1} parent=27 // pred_check_branch
          %242 = sbr.rel (%p240) target = $region44
        $region43: #{tpu_custom_call.1} parent=27 // pred_region
          %v243 = vld [vmem:[#allocation2] sm:$0xff]
          %v244 = vld [vmem:[#allocation2 + $0x8] sm:$0xff]
          %v245 = vmax.f32 %v243, %v209
          %v246 = vmax.f32 %v244, %v216
          %247 = vst.msk [vmem:[#allocation2] sm:$0xff] %vm202, %v245
          %248 = vst.msk [vmem:[#allocation2 + $0x8] sm:$0xff] %vm202, %v246
          %v249 = vld [vmem:[#allocation3] sm:$0xff]
          %v250 = vld [vmem:[#allocation3 + $0x8] sm:$0xff]
          %v251 = vadd.f32 %v249, %v223
          %v252 = vadd.f32 %v250, %v230
          %253 = vst.msk [vmem:[#allocation3] sm:$0xff] %vm202, %v251
          %254 = vst.msk [vmem:[#allocation3 + $0x8] sm:$0xff] %vm202, %v252
        $region44: #{tpu_custom_call.1} parent=27 // pred_fallthru
          _
        // Predicated region
        $region45: #{tpu_custom_call.1} parent=27 // pred_check
          %p255 = pneg %p231
        $region46: #{tpu_custom_call.1} parent=27 // pred_check_branch
          %257 = sbr.rel (%p255) target = $region48
        $region47: #{tpu_custom_call.1} parent=27 // pred_region
          %vm258 = vcmask 179200
          %259 = vst.msk [vmem:[#allocation4] sm:$0xff] %vm258, 0.0
          %260 = vst.msk [vmem:[#allocation4 + $0x8] sm:$0xff] %vm258, 0.0
          %vm261 = vcmask 177152
          %262 = vst.msk [vmem:[#allocation4 + $0x10] sm:$0x3f] %vm261, 0.0
          %263 = vst.msk [vmem:[#allocation4 + $0x18] sm:$0xff] %vm258, 0.0
          %264 = vst.msk [vmem:[#allocation4 + $0x20] sm:$0xff] %vm258, 0.0
          %265 = vst.msk [vmem:[#allocation4 + $0x28] sm:$0x3f] %vm261, 0.0
          %v266 = vld [vmem:[#allocation2] sm:$0xff]
          %v267 = vld [vmem:[#allocation2 + $0x8] sm:$0xff]
          %270 = vrot.lane.b32.xlu0 %v266, 3
          %v271 = vpop.permute.xlu0 %270
          %272 = vrot.lane.b32.xlu0 %v267, 3
          %v273 = vpop.permute.xlu0 %272
          %vm276 = vcmask 154648
          %277 = vst.msk [vmem:[#allocation4 + $0x3] sm:$0xff] %vm276, %v271
          %278 = vst.msk [vmem:[#allocation4 + $0xb] sm:$0xff] %vm276, %v273
          %v279 = vld [vmem:[#allocation3] sm:$0xff]
          %v280 = vld [vmem:[#allocation3 + $0x8] sm:$0xff]
          %283 = vrot.lane.b32.xlu0 %v279, 3
          %v284 = vpop.permute.xlu0 %283
          %285 = vrot.lane.b32.xlu0 %v280, 3
          %v286 = vpop.permute.xlu0 %285
          %s289 = scalar_lea.vmem [#allocation4], 24
          %290 = vst.msk [vmem:[%s289 + $0x3] sm:$0xff] %vm276, %v284
          %291 = vst.msk [vmem:[%s289 + $0xb] sm:$0xff] %vm276, %v286
          %s292 = sld [smem:[#allocation9]]
          %v293 = vld [vmem:[#allocation4] sm:$0xff]
          %v294 = vld [vmem:[#allocation4 + $0x8] sm:$0xff]
          %v295 = vstv %s292
          %v296 = vmul.f32 %v295, %v293
          %v297 = vmul.f32 %v295, %v294
          %v298 = vadd.f32 %v296, 0.0
          %v299 = vadd.f32 %v297, 0.0
          %s300 = sld [smem:[#allocation9 + $0x1]]
          %v301 = vstv %s300
          %v302 = vmul.f32 %v301, %v293
          %v303 = vmul.f32 %v301, %v294
          %306 = vrot.lane.b32.xlu0 %v302, 127
          %v307 = vpop.permute.xlu0 %306
          %308 = vrot.lane.b32.xlu0 %v303, 127
          %v309 = vpop.permute.xlu0 %308
          %v312 = vadd.f32 %v298, %v307
          %v313 = vadd.f32 %v299, %v309
          %s314 = sld [smem:[#allocation9 + $0x2]]
          %v315 = vstv %s314
          %v316 = vmul.f32 %v315, %v293
          %v317 = vmul.f32 %v315, %v294
          %320 = vrot.lane.b32.xlu0 %v316, 126
          %v321 = vpop.permute.xlu0 %320
          %322 = vrot.lane.b32.xlu0 %v317, 126
          %v323 = vpop.permute.xlu0 %322
          %v326 = vadd.f32 %v312, %v321
          %v327 = vadd.f32 %v313, %v323
          %s328 = sld [smem:[#allocation9 + $0x3]]
          %v329 = vstv %s328
          %v330 = vmul.f32 %v329, %v293
          %v331 = vmul.f32 %v329, %v294
          %334 = vrot.lane.b32.xlu0 %v330, 125
          %v335 = vpop.permute.xlu0 %334
          %336 = vrot.lane.b32.xlu0 %v331, 125
          %v337 = vpop.permute.xlu0 %336
          %v340 = vadd.f32 %v326, %v335
          %v341 = vadd.f32 %v327, %v337
          %s342 = sld [smem:[#allocation9 + $0x4]]
          %v343 = vstv %s342
          %v344 = vmul.f32 %v343, %v293
          %v345 = vmul.f32 %v343, %v294
          %348 = vrot.lane.b32.xlu0 %v344, 124
          %v349 = vpop.permute.xlu0 %348
          %350 = vrot.lane.b32.xlu0 %v345, 124
          %v351 = vpop.permute.xlu0 %350
          %v354 = vadd.f32 %v340, %v349
          %v355 = vadd.f32 %v341, %v351
          %s356 = sld [smem:[#allocation9 + $0x5]]
          %v357 = vstv %s356
          %v358 = vmul.f32 %v357, %v293
          %v359 = vmul.f32 %v357, %v294
          %362 = vrot.lane.b32.xlu0 %v358, 123
          %v363 = vpop.permute.xlu0 %362
          %364 = vrot.lane.b32.xlu0 %v359, 123
          %v365 = vpop.permute.xlu0 %364
          %v368 = vadd.f32 %v354, %v363
          %v369 = vadd.f32 %v355, %v365
          %s370 = sld [smem:[#allocation9 + $0x6]]
          %v371 = vstv %s370
          %v372 = vmul.f32 %v371, %v293
          %v373 = vmul.f32 %v371, %v294
          %376 = vrot.lane.b32.xlu0 %v372, 122
          %v377 = vpop.permute.xlu0 %376
          %378 = vrot.lane.b32.xlu0 %v373, 122
          %v379 = vpop.permute.xlu0 %378
          %v382 = vadd.f32 %v368, %v377
          %v383 = vadd.f32 %v369, %v379
          %s384 = sld [smem:[#allocation9 + $0x7]]
          %v385 = vld [vmem:[#allocation4 + $0x1] sm:$0xff]
          %v386 = vld [vmem:[#allocation4 + $0x9] sm:$0xff]
          %v387 = vstv %s384
          %v388 = vmul.f32 %v387, %v385
          %v389 = vmul.f32 %v387, %v386
          %v390 = vadd.f32 %v382, %v388
          %v391 = vadd.f32 %v383, %v389
          %s392 = sld [smem:[#allocation9 + $0x8]]
          %v393 = vstv %s392
          %v394 = vmul.f32 %v393, %v385
          %v395 = vmul.f32 %v393, %v386
          %398 = vrot.lane.b32.xlu0 %v394, 127
          %v399 = vpop.permute.xlu0 %398
          %400 = vrot.lane.b32.xlu0 %v395, 127
          %v401 = vpop.permute.xlu0 %400
          %v404 = vadd.f32 %v390, %v399
          %v405 = vadd.f32 %v391, %v401
          %s406 = sld [smem:[#allocation9 + $0x9]]
          %v407 = vstv %s406
          %v408 = vmul.f32 %v407, %v385
          %v409 = vmul.f32 %v407, %v386
          %412 = vrot.lane.b32.xlu0 %v408, 126
          %v413 = vpop.permute.xlu0 %412
          %414 = vrot.lane.b32.xlu0 %v409, 126
          %v415 = vpop.permute.xlu0 %414
          %v418 = vadd.f32 %v404, %v413
          %v419 = vadd.f32 %v405, %v415
          %s420 = sld [smem:[#allocation9 + $0xa]]
          %v421 = vstv %s420
          %v422 = vmul.f32 %v421, %v385
          %v423 = vmul.f32 %v421, %v386
          %426 = vrot.lane.b32.xlu0 %v422, 125
          %v427 = vpop.permute.xlu0 %426
          %428 = vrot.lane.b32.xlu0 %v423, 125
          %v429 = vpop.permute.xlu0 %428
          %v432 = vadd.f32 %v418, %v427
          %v433 = vadd.f32 %v419, %v429
          %s434 = sld [smem:[#allocation9 + $0xb]]
          %v435 = vstv %s434
          %v436 = vmul.f32 %v435, %v385
          %v437 = vmul.f32 %v435, %v386
          %440 = vrot.lane.b32.xlu0 %v436, 124
          %v441 = vpop.permute.xlu0 %440
          %442 = vrot.lane.b32.xlu0 %v437, 124
          %v443 = vpop.permute.xlu0 %442
          %v446 = vadd.f32 %v432, %v441
          %v447 = vadd.f32 %v433, %v443
          %s448 = sld [smem:[#allocation9 + $0xc]]
          %v449 = vstv %s448
          %v450 = vmul.f32 %v449, %v385
          %v451 = vmul.f32 %v449, %v386
          %454 = vrot.lane.b32.xlu0 %v450, 123
          %v455 = vpop.permute.xlu0 %454
          %456 = vrot.lane.b32.xlu0 %v451, 123
          %v457 = vpop.permute.xlu0 %456
          %v460 = vadd.f32 %v446, %v455
          %v461 = vadd.f32 %v447, %v457
          %s462 = sld [smem:[#allocation9 + $0xd]]
          %v463 = vstv %s462
          %v464 = vmul.f32 %v463, %v385
          %v465 = vmul.f32 %v463, %v386
          %468 = vrot.lane.b32.xlu0 %v464, 122
          %v469 = vpop.permute.xlu0 %468
          %470 = vrot.lane.b32.xlu0 %v465, 122
          %v471 = vpop.permute.xlu0 %470
          %v474 = vadd.f32 %v460, %v469
          %v475 = vadd.f32 %v461, %v471
          %s476 = sld [smem:[#allocation9 + $0xe]]
          %v477 = vld [vmem:[#allocation4 + $0x2] sm:$0xff]
          %v478 = vld [vmem:[#allocation4 + $0xa] sm:$0xff]
          %v479 = vstv %s476
          %v480 = vmul.f32 %v479, %v477
          %v481 = vmul.f32 %v479, %v478
          %v482 = vadd.f32 %v474, %v480
          %v483 = vadd.f32 %v475, %v481
          %s484 = sld [smem:[#allocation9 + $0xf]]
          %v485 = vstv %s484
          %v486 = vmul.f32 %v485, %v477
          %v487 = vmul.f32 %v485, %v478
          %490 = vrot.lane.b32.xlu0 %v486, 127
          %v491 = vpop.permute.xlu0 %490
          %492 = vrot.lane.b32.xlu0 %v487, 127
          %v493 = vpop.permute.xlu0 %492
          %v496 = vadd.f32 %v482, %v491
          %v497 = vadd.f32 %v483, %v493
          %s498 = sld [smem:[#allocation9 + $0x10]]
          %v499 = vstv %s498
          %v500 = vmul.f32 %v499, %v477
          %v501 = vmul.f32 %v499, %v478
          %504 = vrot.lane.b32.xlu0 %v500, 126
          %v505 = vpop.permute.xlu0 %504
          %506 = vrot.lane.b32.xlu0 %v501, 126
          %v507 = vpop.permute.xlu0 %506
          %v510 = vadd.f32 %v496, %v505
          %v511 = vadd.f32 %v497, %v507
          %s512 = sld [smem:[#allocation9 + $0x11]]
          %v513 = vstv %s512
          %v514 = vmul.f32 %v513, %v477
          %v515 = vmul.f32 %v513, %v478
          %518 = vrot.lane.b32.xlu0 %v514, 125
          %v519 = vpop.permute.xlu0 %518
          %520 = vrot.lane.b32.xlu0 %v515, 125
          %v521 = vpop.permute.xlu0 %520
          %v524 = vadd.f32 %v510, %v519
          %v525 = vadd.f32 %v511, %v521
          %s526 = sld [smem:[#allocation9 + $0x12]]
          %v527 = vstv %s526
          %v528 = vmul.f32 %v527, %v477
          %v529 = vmul.f32 %v527, %v478
          %532 = vrot.lane.b32.xlu0 %v528, 124
          %v533 = vpop.permute.xlu0 %532
          %534 = vrot.lane.b32.xlu0 %v529, 124
          %v535 = vpop.permute.xlu0 %534
          %v538 = vadd.f32 %v524, %v533
          %v539 = vadd.f32 %v525, %v535
          %s540 = sld [smem:[#allocation9 + $0x13]]
          %v541 = vstv %s540
          %v542 = vmul.f32 %v541, %v477
          %v543 = vmul.f32 %v541, %v478
          %546 = vrot.lane.b32.xlu0 %v542, 123
          %v547 = vpop.permute.xlu0 %546
          %548 = vrot.lane.b32.xlu0 %v543, 123
          %v549 = vpop.permute.xlu0 %548
          %v552 = vadd.f32 %v538, %v547
          %v553 = vadd.f32 %v539, %v549
          %s554 = sld [smem:[#allocation9 + $0x14]]
          %v555 = vstv %s554
          %v556 = vmul.f32 %v555, %v477
          %v557 = vmul.f32 %v555, %v478
          %560 = vrot.lane.b32.xlu0 %v556, 122
          %v561 = vpop.permute.xlu0 %560
          %562 = vrot.lane.b32.xlu0 %v557, 122
          %v563 = vpop.permute.xlu0 %562
          %v566 = vadd.f32 %v552, %v561
          %v567 = vadd.f32 %v553, %v563
          %s568 = sld [smem:[#allocation9 + $0x15]]
          %v569 = vld [vmem:[#allocation4 + $0x3] sm:$0xff]
          %v570 = vld [vmem:[#allocation4 + $0xb] sm:$0xff]
          %v571 = vstv %s568
          %v572 = vmul.f32 %v571, %v569
          %v573 = vmul.f32 %v571, %v570
          %v574 = vadd.f32 %v566, %v572
          %v575 = vadd.f32 %v567, %v573
          %s576 = sld [smem:[#allocation9 + $0x16]]
          %v577 = vstv %s576
          %v578 = vmul.f32 %v577, %v569
          %v579 = vmul.f32 %v577, %v570
          %582 = vrot.lane.b32.xlu0 %v578, 127
          %v583 = vpop.permute.xlu0 %582
          %584 = vrot.lane.b32.xlu0 %v579, 127
          %v585 = vpop.permute.xlu0 %584
          %v588 = vadd.f32 %v574, %v583
          %v589 = vadd.f32 %v575, %v585
          %s590 = sld [smem:[#allocation9 + $0x17]]
          %v591 = vstv %s590
          %v592 = vmul.f32 %v591, %v569
          %v593 = vmul.f32 %v591, %v570
          %596 = vrot.lane.b32.xlu0 %v592, 126
          %v597 = vpop.permute.xlu0 %596
          %598 = vrot.lane.b32.xlu0 %v593, 126
          %v599 = vpop.permute.xlu0 %598
          %v602 = vadd.f32 %v588, %v597
          %v603 = vadd.f32 %v589, %v599
          %s604 = sld [smem:[#allocation9 + $0x18]]
          %v605 = vstv %s604
          %v606 = vmul.f32 %v605, %v569
          %v607 = vmul.f32 %v605, %v570
          %610 = vrot.lane.b32.xlu0 %v606, 125
          %v611 = vpop.permute.xlu0 %610
          %612 = vrot.lane.b32.xlu0 %v607, 125
          %v613 = vpop.permute.xlu0 %612
          %v616 = vadd.f32 %v602, %v611
          %v617 = vadd.f32 %v603, %v613
          %s618 = sld [smem:[#allocation9 + $0x19]]
          %v619 = vstv %s618
          %v620 = vmul.f32 %v619, %v569
          %v621 = vmul.f32 %v619, %v570
          %624 = vrot.lane.b32.xlu0 %v620, 124
          %v625 = vpop.permute.xlu0 %624
          %626 = vrot.lane.b32.xlu0 %v621, 124
          %v627 = vpop.permute.xlu0 %626
          %v630 = vadd.f32 %v616, %v625
          %v631 = vadd.f32 %v617, %v627
          %s632 = sld [smem:[#allocation9 + $0x1a]]
          %v633 = vstv %s632
          %v634 = vmul.f32 %v633, %v569
          %v635 = vmul.f32 %v633, %v570
          %638 = vrot.lane.b32.xlu0 %v634, 123
          %v639 = vpop.permute.xlu0 %638
          %640 = vrot.lane.b32.xlu0 %v635, 123
          %v641 = vpop.permute.xlu0 %640
          %v644 = vadd.f32 %v630, %v639
          %v645 = vadd.f32 %v631, %v641
          %s646 = sld [smem:[#allocation9 + $0x1b]]
          %v647 = vstv %s646
          %v648 = vmul.f32 %v647, %v569
          %v649 = vmul.f32 %v647, %v570
          %652 = vrot.lane.b32.xlu0 %v648, 122
          %v653 = vpop.permute.xlu0 %652
          %654 = vrot.lane.b32.xlu0 %v649, 122
          %v655 = vpop.permute.xlu0 %654
          %v658 = vadd.f32 %v644, %v653
          %v659 = vadd.f32 %v645, %v655
          %s660 = sld [smem:[#allocation9 + $0x1c]]
          %v661 = vld [vmem:[#allocation4 + $0x4] sm:$0xff]
          %v662 = vld [vmem:[#allocation4 + $0xc] sm:$0xff]
          %v663 = vstv %s660
          %v664 = vmul.f32 %v663, %v661
          %v665 = vmul.f32 %v663, %v662
          %v666 = vadd.f32 %v658, %v664
          %v667 = vadd.f32 %v659, %v665
          %s668 = sld [smem:[#allocation9 + $0x1d]]
          %v669 = vstv %s668
          %v670 = vmul.f32 %v669, %v661
          %v671 = vmul.f32 %v669, %v662
          %674 = vrot.lane.b32.xlu0 %v670, 127
          %v675 = vpop.permute.xlu0 %674
          %676 = vrot.lane.b32.xlu0 %v671, 127
          %v677 = vpop.permute.xlu0 %676
          %v680 = vadd.f32 %v666, %v675
          %v681 = vadd.f32 %v667, %v677
          %s682 = sld [smem:[#allocation9 + $0x1e]]
          %v683 = vstv %s682
          %v684 = vmul.f32 %v683, %v661
          %v685 = vmul.f32 %v683, %v662
          %688 = vrot.lane.b32.xlu0 %v684, 126
          %v689 = vpop.permute.xlu0 %688
          %690 = vrot.lane.b32.xlu0 %v685, 126
          %v691 = vpop.permute.xlu0 %690
          %v694 = vadd.f32 %v680, %v689
          %v695 = vadd.f32 %v681, %v691
          %s696 = sld [smem:[#allocation9 + $0x1f]]
          %v697 = vstv %s696
          %v698 = vmul.f32 %v697, %v661
          %v699 = vmul.f32 %v697, %v662
          %702 = vrot.lane.b32.xlu0 %v698, 125
          %v703 = vpop.permute.xlu0 %702
          %704 = vrot.lane.b32.xlu0 %v699, 125
          %v705 = vpop.permute.xlu0 %704
          %v708 = vadd.f32 %v694, %v703
          %v709 = vadd.f32 %v695, %v705
          %s710 = sld [smem:[#allocation9 + $0x20]]
          %v711 = vstv %s710
          %v712 = vmul.f32 %v711, %v661
          %v713 = vmul.f32 %v711, %v662
          %716 = vrot.lane.b32.xlu0 %v712, 124
          %v717 = vpop.permute.xlu0 %716
          %718 = vrot.lane.b32.xlu0 %v713, 124
          %v719 = vpop.permute.xlu0 %718
          %v722 = vadd.f32 %v708, %v717
          %v723 = vadd.f32 %v709, %v719
          %s724 = sld [smem:[#allocation9 + $0x21]]
          %v725 = vstv %s724
          %v726 = vmul.f32 %v725, %v661
          %v727 = vmul.f32 %v725, %v662
          %730 = vrot.lane.b32.xlu0 %v726, 123
          %v731 = vpop.permute.xlu0 %730
          %732 = vrot.lane.b32.xlu0 %v727, 123
          %v733 = vpop.permute.xlu0 %732
          %v736 = vadd.f32 %v722, %v731
          %v737 = vadd.f32 %v723, %v733
          %s738 = sld [smem:[#allocation9 + $0x22]]
          %v739 = vstv %s738
          %v740 = vmul.f32 %v739, %v661
          %v741 = vmul.f32 %v739, %v662
          %744 = vrot.lane.b32.xlu0 %v740, 122
          %v745 = vpop.permute.xlu0 %744
          %746 = vrot.lane.b32.xlu0 %v741, 122
          %v747 = vpop.permute.xlu0 %746
          %v750 = vadd.f32 %v736, %v745
          %v751 = vadd.f32 %v737, %v747
          %s752 = sld [smem:[#allocation9 + $0x23]]
          %v753 = vld [vmem:[#allocation4 + $0x5] sm:$0xff]
          %v754 = vld [vmem:[#allocation4 + $0xd] sm:$0xff]
          %v755 = vstv %s752
          %v756 = vmul.f32 %v755, %v753
          %v757 = vmul.f32 %v755, %v754
          %v758 = vadd.f32 %v750, %v756
          %v759 = vadd.f32 %v751, %v757
          %s760 = sld [smem:[#allocation9 + $0x24]]
          %v761 = vstv %s760
          %v762 = vmul.f32 %v761, %v753
          %v763 = vmul.f32 %v761, %v754
          %766 = vrot.lane.b32.xlu0 %v762, 127
          %v767 = vpop.permute.xlu0 %766
          %768 = vrot.lane.b32.xlu0 %v763, 127
          %v769 = vpop.permute.xlu0 %768
          %v772 = vadd.f32 %v758, %v767
          %v773 = vadd.f32 %v759, %v769
          %s774 = sld [smem:[#allocation9 + $0x25]]
          %v775 = vstv %s774
          %v776 = vmul.f32 %v775, %v753
          %v777 = vmul.f32 %v775, %v754
          %780 = vrot.lane.b32.xlu0 %v776, 126
          %v781 = vpop.permute.xlu0 %780
          %782 = vrot.lane.b32.xlu0 %v777, 126
          %v783 = vpop.permute.xlu0 %782
          %v786 = vadd.f32 %v772, %v781
          %v787 = vadd.f32 %v773, %v783
          %s788 = sld [smem:[#allocation9 + $0x26]]
          %v789 = vstv %s788
          %v790 = vmul.f32 %v789, %v753
          %v791 = vmul.f32 %v789, %v754
          %794 = vrot.lane.b32.xlu0 %v790, 125
          %v795 = vpop.permute.xlu0 %794
          %796 = vrot.lane.b32.xlu0 %v791, 125
          %v797 = vpop.permute.xlu0 %796
          %v800 = vadd.f32 %v786, %v795
          %v801 = vadd.f32 %v787, %v797
          %s802 = sld [smem:[#allocation9 + $0x27]]
          %v803 = vstv %s802
          %v804 = vmul.f32 %v803, %v753
          %v805 = vmul.f32 %v803, %v754
          %808 = vrot.lane.b32.xlu0 %v804, 124
          %v809 = vpop.permute.xlu0 %808
          %810 = vrot.lane.b32.xlu0 %v805, 124
          %v811 = vpop.permute.xlu0 %810
          %v814 = vadd.f32 %v800, %v809
          %v815 = vadd.f32 %v801, %v811
          %s816 = sld [smem:[#allocation9 + $0x28]]
          %v817 = vstv %s816
          %v818 = vmul.f32 %v817, %v753
          %v819 = vmul.f32 %v817, %v754
          %822 = vrot.lane.b32.xlu0 %v818, 123
          %v823 = vpop.permute.xlu0 %822
          %824 = vrot.lane.b32.xlu0 %v819, 123
          %v825 = vpop.permute.xlu0 %824
          %v828 = vadd.f32 %v814, %v823
          %v829 = vadd.f32 %v815, %v825
          %s830 = sld [smem:[#allocation9 + $0x29]]
          %v831 = vstv %s830
          %v832 = vmul.f32 %v831, %v753
          %v833 = vmul.f32 %v831, %v754
          %836 = vrot.lane.b32.xlu0 %v832, 122
          %v837 = vpop.permute.xlu0 %836
          %838 = vrot.lane.b32.xlu0 %v833, 122
          %v839 = vpop.permute.xlu0 %838
          %v842 = vadd.f32 %v828, %v837
          %v843 = vadd.f32 %v829, %v839
          %s844 = sld [smem:[#allocation9 + $0x2a]]
          %v845 = vld [vmem:[#allocation4 + $0x6] sm:$0xff]
          %v846 = vld [vmem:[#allocation4 + $0xe] sm:$0xff]
          %v847 = vstv %s844
          %v848 = vmul.f32 %v847, %v845
          %v849 = vmul.f32 %v847, %v846
          %v850 = vadd.f32 %v842, %v848
          %v851 = vadd.f32 %v843, %v849
          %s852 = sld [smem:[#allocation9 + $0x2b]]
          %v853 = vstv %s852
          %v854 = vmul.f32 %v853, %v845
          %v855 = vmul.f32 %v853, %v846
          %858 = vrot.lane.b32.xlu0 %v854, 127
          %v859 = vpop.permute.xlu0 %858
          %860 = vrot.lane.b32.xlu0 %v855, 127
          %v861 = vpop.permute.xlu0 %860
          %v864 = vadd.f32 %v850, %v859
          %v865 = vadd.f32 %v851, %v861
          %s866 = sld [smem:[#allocation9 + $0x2c]]
          %v867 = vstv %s866
          %v868 = vmul.f32 %v867, %v845
          %v869 = vmul.f32 %v867, %v846
          %872 = vrot.lane.b32.xlu0 %v868, 126
          %v873 = vpop.permute.xlu0 %872
          %874 = vrot.lane.b32.xlu0 %v869, 126
          %v875 = vpop.permute.xlu0 %874
          %v878 = vadd.f32 %v864, %v873
          %v879 = vadd.f32 %v865, %v875
          %s880 = sld [smem:[#allocation9 + $0x2d]]
          %v881 = vstv %s880
          %v882 = vmul.f32 %v881, %v845
          %v883 = vmul.f32 %v881, %v846
          %886 = vrot.lane.b32.xlu0 %v882, 125
          %v887 = vpop.permute.xlu0 %886
          %888 = vrot.lane.b32.xlu0 %v883, 125
          %v889 = vpop.permute.xlu0 %888
          %v892 = vadd.f32 %v878, %v887
          %v893 = vadd.f32 %v879, %v889
          %s894 = sld [smem:[#allocation9 + $0x2e]]
          %v895 = vstv %s894
          %v896 = vmul.f32 %v895, %v845
          %v897 = vmul.f32 %v895, %v846
          %900 = vrot.lane.b32.xlu0 %v896, 124
          %v901 = vpop.permute.xlu0 %900
          %902 = vrot.lane.b32.xlu0 %v897, 124
          %v903 = vpop.permute.xlu0 %902
          %v906 = vadd.f32 %v892, %v901
          %v907 = vadd.f32 %v893, %v903
          %s908 = sld [smem:[#allocation9 + $0x2f]]
          %v909 = vstv %s908
          %v910 = vmul.f32 %v909, %v845
          %v911 = vmul.f32 %v909, %v846
          %914 = vrot.lane.b32.xlu0 %v910, 123
          %v915 = vpop.permute.xlu0 %914
          %916 = vrot.lane.b32.xlu0 %v911, 123
          %v917 = vpop.permute.xlu0 %916
          %v920 = vadd.f32 %v906, %v915
          %v921 = vadd.f32 %v907, %v917
          %s922 = sld [smem:[#allocation9 + $0x30]]
          %v923 = vstv %s922
          %v924 = vmul.f32 %v923, %v845
          %v925 = vmul.f32 %v923, %v846
          %928 = vrot.lane.b32.xlu0 %v924, 122
          %v929 = vpop.permute.xlu0 %928
          %930 = vrot.lane.b32.xlu0 %v925, 122
          %v931 = vpop.permute.xlu0 %930
          %v934 = vadd.f32 %v920, %v929
          %v935 = vadd.f32 %v921, %v931
          %s936 = sld [smem:[#allocation9 + $0x31]]
          %v937 = vld [vmem:[%s289] sm:$0xff]
          %v938 = vld [vmem:[%s289 + $0x8] sm:$0xff]
          %v939 = vstv %s936
          %v940 = vmul.f32 %v939, %v937
          %v941 = vmul.f32 %v939, %v938
          %v942 = vadd.f32 %v934, %v940
          %v943 = vadd.f32 %v935, %v941
          %s944 = sld [smem:[#allocation9 + $0x32]]
          %v945 = vstv %s944
          %v946 = vmul.f32 %v945, %v937
          %v947 = vmul.f32 %v945, %v938
          %950 = vrot.lane.b32.xlu0 %v946, 127
          %v951 = vpop.permute.xlu0 %950
          %952 = vrot.lane.b32.xlu0 %v947, 127
          %v953 = vpop.permute.xlu0 %952
          %v956 = vadd.f32 %v942, %v951
          %v957 = vadd.f32 %v943, %v953
          %s958 = sld [smem:[#allocation9 + $0x33]]
          %v959 = vstv %s958
          %v960 = vmul.f32 %v959, %v937
          %v961 = vmul.f32 %v959, %v938
          %964 = vrot.lane.b32.xlu0 %v960, 126
          %v965 = vpop.permute.xlu0 %964
          %966 = vrot.lane.b32.xlu0 %v961, 126
          %v967 = vpop.permute.xlu0 %966
          %v970 = vadd.f32 %v956, %v965
          %v971 = vadd.f32 %v957, %v967
          %s972 = sld [smem:[#allocation9 + $0x34]]
          %v973 = vstv %s972
          %v974 = vmul.f32 %v973, %v937
          %v975 = vmul.f32 %v973, %v938
          %978 = vrot.lane.b32.xlu0 %v974, 125
          %v979 = vpop.permute.xlu0 %978
          %980 = vrot.lane.b32.xlu0 %v975, 125
          %v981 = vpop.permute.xlu0 %980
          %v984 = vadd.f32 %v970, %v979
          %v985 = vadd.f32 %v971, %v981
          %s986 = sld [smem:[#allocation9 + $0x35]]
          %v987 = vstv %s986
          %v988 = vmul.f32 %v987, %v937
          %v989 = vmul.f32 %v987, %v938
          %992 = vrot.lane.b32.xlu0 %v988, 124
          %v993 = vpop.permute.xlu0 %992
          %994 = vrot.lane.b32.xlu0 %v989, 124
          %v995 = vpop.permute.xlu0 %994
          %v998 = vadd.f32 %v984, %v993
          %v999 = vadd.f32 %v985, %v995
          %s1000 = sld [smem:[#allocation9 + $0x36]]
          %v1001 = vstv %s1000
          %v1002 = vmul.f32 %v1001, %v937
          %v1003 = vmul.f32 %v1001, %v938
          %1006 = vrot.lane.b32.xlu0 %v1002, 123
          %v1007 = vpop.permute.xlu0 %1006
          %1008 = vrot.lane.b32.xlu0 %v1003, 123
          %v1009 = vpop.permute.xlu0 %1008
          %v1012 = vadd.f32 %v998, %v1007
          %v1013 = vadd.f32 %v999, %v1009
          %s1014 = sld [smem:[#allocation9 + $0x37]]
          %v1015 = vstv %s1014
          %v1016 = vmul.f32 %v1015, %v937
          %v1017 = vmul.f32 %v1015, %v938
          %1020 = vrot.lane.b32.xlu0 %v1016, 122
          %v1021 = vpop.permute.xlu0 %1020
          %1022 = vrot.lane.b32.xlu0 %v1017, 122
          %v1023 = vpop.permute.xlu0 %1022
          %v1026 = vadd.f32 %v1012, %v1021
          %v1027 = vadd.f32 %v1013, %v1023
          %s1028 = sld [smem:[#allocation9 + $0x38]]
          %v1029 = vld [vmem:[%s289 + $0x1] sm:$0xff]
          %v1030 = vld [vmem:[%s289 + $0x9] sm:$0xff]
          %v1031 = vstv %s1028
          %v1032 = vmul.f32 %v1031, %v1029
          %v1033 = vmul.f32 %v1031, %v1030
          %v1034 = vadd.f32 %v1026, %v1032
          %v1035 = vadd.f32 %v1027, %v1033
          %s1036 = sld [smem:[#allocation9 + $0x39]]
          %v1037 = vstv %s1036
          %v1038 = vmul.f32 %v1037, %v1029
          %v1039 = vmul.f32 %v1037, %v1030
          %1042 = vrot.lane.b32.xlu0 %v1038, 127
          %v1043 = vpop.permute.xlu0 %1042
          %1044 = vrot.lane.b32.xlu0 %v1039, 127
          %v1045 = vpop.permute.xlu0 %1044
          %v1048 = vadd.f32 %v1034, %v1043
          %v1049 = vadd.f32 %v1035, %v1045
          %s1050 = sld [smem:[#allocation9 + $0x3a]]
          %v1051 = vstv %s1050
          %v1052 = vmul.f32 %v1051, %v1029
          %v1053 = vmul.f32 %v1051, %v1030
          %1056 = vrot.lane.b32.xlu0 %v1052, 126
          %v1057 = vpop.permute.xlu0 %1056
          %1058 = vrot.lane.b32.xlu0 %v1053, 126
          %v1059 = vpop.permute.xlu0 %1058
          %v1062 = vadd.f32 %v1048, %v1057
          %v1063 = vadd.f32 %v1049, %v1059
          %s1064 = sld [smem:[#allocation9 + $0x3b]]
          %v1065 = vstv %s1064
          %v1066 = vmul.f32 %v1065, %v1029
          %v1067 = vmul.f32 %v1065, %v1030
          %1070 = vrot.lane.b32.xlu0 %v1066, 125
          %v1071 = vpop.permute.xlu0 %1070
          %1072 = vrot.lane.b32.xlu0 %v1067, 125
          %v1073 = vpop.permute.xlu0 %1072
          %v1076 = vadd.f32 %v1062, %v1071
          %v1077 = vadd.f32 %v1063, %v1073
          %s1078 = sld [smem:[#allocation9 + $0x3c]]
          %v1079 = vstv %s1078
          %v1080 = vmul.f32 %v1079, %v1029
          %v1081 = vmul.f32 %v1079, %v1030
          %1084 = vrot.lane.b32.xlu0 %v1080, 124
          %v1085 = vpop.permute.xlu0 %1084
          %1086 = vrot.lane.b32.xlu0 %v1081, 124
          %v1087 = vpop.permute.xlu0 %1086
          %v1090 = vadd.f32 %v1076, %v1085
          %v1091 = vadd.f32 %v1077, %v1087
          %s1092 = sld [smem:[#allocation9 + $0x3d]]
          %v1093 = vstv %s1092
          %v1094 = vmul.f32 %v1093, %v1029
          %v1095 = vmul.f32 %v1093, %v1030
          %1098 = vrot.lane.b32.xlu0 %v1094, 123
          %v1099 = vpop.permute.xlu0 %1098
          %1100 = vrot.lane.b32.xlu0 %v1095, 123
          %v1101 = vpop.permute.xlu0 %1100
          %v1104 = vadd.f32 %v1090, %v1099
          %v1105 = vadd.f32 %v1091, %v1101
          %s1106 = sld [smem:[#allocation9 + $0x3e]]
          %v1107 = vstv %s1106
          %v1108 = vmul.f32 %v1107, %v1029
          %v1109 = vmul.f32 %v1107, %v1030
          %1112 = vrot.lane.b32.xlu0 %v1108, 122
          %v1113 = vpop.permute.xlu0 %1112
          %1114 = vrot.lane.b32.xlu0 %v1109, 122
          %v1115 = vpop.permute.xlu0 %1114
          %v1118 = vadd.f32 %v1104, %v1113
          %v1119 = vadd.f32 %v1105, %v1115
          %s1120 = sld [smem:[#allocation9 + $0x3f]]
          %v1121 = vld [vmem:[%s289 + $0x2] sm:$0xff]
          %v1122 = vld [vmem:[%s289 + $0xa] sm:$0xff]
          %v1123 = vstv %s1120
          %v1124 = vmul.f32 %v1123, %v1121
          %v1125 = vmul.f32 %v1123, %v1122
          %v1126 = vadd.f32 %v1118, %v1124
          %v1127 = vadd.f32 %v1119, %v1125
          %s1128 = sld [smem:[#allocation9 + $0x40]]
          %v1129 = vstv %s1128
          %v1130 = vmul.f32 %v1129, %v1121
          %v1131 = vmul.f32 %v1129, %v1122
          %1134 = vrot.lane.b32.xlu0 %v1130, 127
          %v1135 = vpop.permute.xlu0 %1134
          %1136 = vrot.lane.b32.xlu0 %v1131, 127
          %v1137 = vpop.permute.xlu0 %1136
          %v1140 = vadd.f32 %v1126, %v1135
          %v1141 = vadd.f32 %v1127, %v1137
          %s1142 = sld [smem:[#allocation9 + $0x41]]
          %v1143 = vstv %s1142
          %v1144 = vmul.f32 %v1143, %v1121
          %v1145 = vmul.f32 %v1143, %v1122
          %1148 = vrot.lane.b32.xlu0 %v1144, 126
          %v1149 = vpop.permute.xlu0 %1148
          %1150 = vrot.lane.b32.xlu0 %v1145, 126
          %v1151 = vpop.permute.xlu0 %1150
          %v1154 = vadd.f32 %v1140, %v1149
          %v1155 = vadd.f32 %v1141, %v1151
          %s1156 = sld [smem:[#allocation9 + $0x42]]
          %v1157 = vstv %s1156
          %v1158 = vmul.f32 %v1157, %v1121
          %v1159 = vmul.f32 %v1157, %v1122
          %1162 = vrot.lane.b32.xlu0 %v1158, 125
          %v1163 = vpop.permute.xlu0 %1162
          %1164 = vrot.lane.b32.xlu0 %v1159, 125
          %v1165 = vpop.permute.xlu0 %1164
          %v1168 = vadd.f32 %v1154, %v1163
          %v1169 = vadd.f32 %v1155, %v1165
          %s1170 = sld [smem:[#allocation9 + $0x43]]
          %v1171 = vstv %s1170
          %v1172 = vmul.f32 %v1171, %v1121
          %v1173 = vmul.f32 %v1171, %v1122
          %1176 = vrot.lane.b32.xlu0 %v1172, 124
          %v1177 = vpop.permute.xlu0 %1176
          %1178 = vrot.lane.b32.xlu0 %v1173, 124
          %v1179 = vpop.permute.xlu0 %1178
          %v1182 = vadd.f32 %v1168, %v1177
          %v1183 = vadd.f32 %v1169, %v1179
          %s1184 = sld [smem:[#allocation9 + $0x44]]
          %v1185 = vstv %s1184
          %v1186 = vmul.f32 %v1185, %v1121
          %v1187 = vmul.f32 %v1185, %v1122
          %1190 = vrot.lane.b32.xlu0 %v1186, 123
          %v1191 = vpop.permute.xlu0 %1190
          %1192 = vrot.lane.b32.xlu0 %v1187, 123
          %v1193 = vpop.permute.xlu0 %1192
          %v1196 = vadd.f32 %v1182, %v1191
          %v1197 = vadd.f32 %v1183, %v1193
          %s1198 = sld [smem:[#allocation9 + $0x45]]
          %v1199 = vstv %s1198
          %v1200 = vmul.f32 %v1199, %v1121
          %v1201 = vmul.f32 %v1199, %v1122
          %1204 = vrot.lane.b32.xlu0 %v1200, 122
          %v1205 = vpop.permute.xlu0 %1204
          %1206 = vrot.lane.b32.xlu0 %v1201, 122
          %v1207 = vpop.permute.xlu0 %1206
          %v1210 = vadd.f32 %v1196, %v1205
          %v1211 = vadd.f32 %v1197, %v1207
          %s1212 = sld [smem:[#allocation9 + $0x46]]
          %v1213 = vld [vmem:[%s289 + $0x3] sm:$0xff]
          %v1214 = vld [vmem:[%s289 + $0xb] sm:$0xff]
          %v1215 = vstv %s1212
          %v1216 = vmul.f32 %v1215, %v1213
          %v1217 = vmul.f32 %v1215, %v1214
          %v1218 = vadd.f32 %v1210, %v1216
          %v1219 = vadd.f32 %v1211, %v1217
          %s1220 = sld [smem:[#allocation9 + $0x47]]
          %v1221 = vstv %s1220
          %v1222 = vmul.f32 %v1221, %v1213
          %v1223 = vmul.f32 %v1221, %v1214
          %1226 = vrot.lane.b32.xlu0 %v1222, 127
          %v1227 = vpop.permute.xlu0 %1226
          %1228 = vrot.lane.b32.xlu0 %v1223, 127
          %v1229 = vpop.permute.xlu0 %1228
          %v1232 = vadd.f32 %v1218, %v1227
          %v1233 = vadd.f32 %v1219, %v1229
          %s1234 = sld [smem:[#allocation9 + $0x48]]
          %v1235 = vstv %s1234
          %v1236 = vmul.f32 %v1235, %v1213
          %v1237 = vmul.f32 %v1235, %v1214
          %1240 = vrot.lane.b32.xlu0 %v1236, 126
          %v1241 = vpop.permute.xlu0 %1240
          %1242 = vrot.lane.b32.xlu0 %v1237, 126
          %v1243 = vpop.permute.xlu0 %1242
          %v1246 = vadd.f32 %v1232, %v1241
          %v1247 = vadd.f32 %v1233, %v1243
          %s1248 = sld [smem:[#allocation9 + $0x49]]
          %v1249 = vstv %s1248
          %v1250 = vmul.f32 %v1249, %v1213
          %v1251 = vmul.f32 %v1249, %v1214
          %1254 = vrot.lane.b32.xlu0 %v1250, 125
          %v1255 = vpop.permute.xlu0 %1254
          %1256 = vrot.lane.b32.xlu0 %v1251, 125
          %v1257 = vpop.permute.xlu0 %1256
          %v1260 = vadd.f32 %v1246, %v1255
          %v1261 = vadd.f32 %v1247, %v1257
          %s1262 = sld [smem:[#allocation9 + $0x4a]]
          %v1263 = vstv %s1262
          %v1264 = vmul.f32 %v1263, %v1213
          %v1265 = vmul.f32 %v1263, %v1214
          %1268 = vrot.lane.b32.xlu0 %v1264, 124
          %v1269 = vpop.permute.xlu0 %1268
          %1270 = vrot.lane.b32.xlu0 %v1265, 124
          %v1271 = vpop.permute.xlu0 %1270
          %v1274 = vadd.f32 %v1260, %v1269
          %v1275 = vadd.f32 %v1261, %v1271
          %s1276 = sld [smem:[#allocation9 + $0x4b]]
          %v1277 = vstv %s1276
          %v1278 = vmul.f32 %v1277, %v1213
          %v1279 = vmul.f32 %v1277, %v1214
          %1282 = vrot.lane.b32.xlu0 %v1278, 123
          %v1283 = vpop.permute.xlu0 %1282
          %1284 = vrot.lane.b32.xlu0 %v1279, 123
          %v1285 = vpop.permute.xlu0 %1284
          %v1288 = vadd.f32 %v1274, %v1283
          %v1289 = vadd.f32 %v1275, %v1285
          %s1290 = sld [smem:[#allocation9 + $0x4c]]
          %v1291 = vstv %s1290
          %v1292 = vmul.f32 %v1291, %v1213
          %v1293 = vmul.f32 %v1291, %v1214
          %1296 = vrot.lane.b32.xlu0 %v1292, 122
          %v1297 = vpop.permute.xlu0 %1296
          %1298 = vrot.lane.b32.xlu0 %v1293, 122
          %v1299 = vpop.permute.xlu0 %1298
          %v1302 = vadd.f32 %v1288, %v1297
          %v1303 = vadd.f32 %v1289, %v1299
          %s1304 = sld [smem:[#allocation9 + $0x4d]]
          %v1305 = vld [vmem:[%s289 + $0x4] sm:$0xff]
          %v1306 = vld [vmem:[%s289 + $0xc] sm:$0xff]
          %v1307 = vstv %s1304
          %v1308 = vmul.f32 %v1307, %v1305
          %v1309 = vmul.f32 %v1307, %v1306
          %v1310 = vadd.f32 %v1302, %v1308
          %v1311 = vadd.f32 %v1303, %v1309
          %s1312 = sld [smem:[#allocation9 + $0x4e]]
          %v1313 = vstv %s1312
          %v1314 = vmul.f32 %v1313, %v1305
          %v1315 = vmul.f32 %v1313, %v1306
          %1318 = vrot.lane.b32.xlu0 %v1314, 127
          %v1319 = vpop.permute.xlu0 %1318
          %1320 = vrot.lane.b32.xlu0 %v1315, 127
          %v1321 = vpop.permute.xlu0 %1320
          %v1324 = vadd.f32 %v1310, %v1319
          %v1325 = vadd.f32 %v1311, %v1321
          %s1326 = sld [smem:[#allocation9 + $0x4f]]
          %v1327 = vstv %s1326
          %v1328 = vmul.f32 %v1327, %v1305
          %v1329 = vmul.f32 %v1327, %v1306
          %1332 = vrot.lane.b32.xlu0 %v1328, 126
          %v1333 = vpop.permute.xlu0 %1332
          %1334 = vrot.lane.b32.xlu0 %v1329, 126
          %v1335 = vpop.permute.xlu0 %1334
          %v1338 = vadd.f32 %v1324, %v1333
          %v1339 = vadd.f32 %v1325, %v1335
          %s1340 = sld [smem:[#allocation9 + $0x50]]
          %v1341 = vstv %s1340
          %v1342 = vmul.f32 %v1341, %v1305
          %v1343 = vmul.f32 %v1341, %v1306
          %1346 = vrot.lane.b32.xlu0 %v1342, 125
          %v1347 = vpop.permute.xlu0 %1346
          %1348 = vrot.lane.b32.xlu0 %v1343, 125
          %v1349 = vpop.permute.xlu0 %1348
          %v1352 = vadd.f32 %v1338, %v1347
          %v1353 = vadd.f32 %v1339, %v1349
          %s1354 = sld [smem:[#allocation9 + $0x51]]
          %v1355 = vstv %s1354
          %v1356 = vmul.f32 %v1355, %v1305
          %v1357 = vmul.f32 %v1355, %v1306
          %1360 = vrot.lane.b32.xlu0 %v1356, 124
          %v1361 = vpop.permute.xlu0 %1360
          %1362 = vrot.lane.b32.xlu0 %v1357, 124
          %v1363 = vpop.permute.xlu0 %1362
          %v1366 = vadd.f32 %v1352, %v1361
          %v1367 = vadd.f32 %v1353, %v1363
          %s1368 = sld [smem:[#allocation9 + $0x52]]
          %v1369 = vstv %s1368
          %v1370 = vmul.f32 %v1369, %v1305
          %v1371 = vmul.f32 %v1369, %v1306
          %1374 = vrot.lane.b32.xlu0 %v1370, 123
          %v1375 = vpop.permute.xlu0 %1374
          %1376 = vrot.lane.b32.xlu0 %v1371, 123
          %v1377 = vpop.permute.xlu0 %1376
          %v1380 = vadd.f32 %v1366, %v1375
          %v1381 = vadd.f32 %v1367, %v1377
          %s1382 = sld [smem:[#allocation9 + $0x53]]
          %v1383 = vstv %s1382
          %v1384 = vmul.f32 %v1383, %v1305
          %v1385 = vmul.f32 %v1383, %v1306
          %1388 = vrot.lane.b32.xlu0 %v1384, 122
          %v1389 = vpop.permute.xlu0 %1388
          %1390 = vrot.lane.b32.xlu0 %v1385, 122
          %v1391 = vpop.permute.xlu0 %1390
          %v1394 = vadd.f32 %v1380, %v1389
          %v1395 = vadd.f32 %v1381, %v1391
          %s1396 = sld [smem:[#allocation9 + $0x54]]
          %v1397 = vld [vmem:[%s289 + $0x5] sm:$0xff]
          %v1398 = vld [vmem:[%s289 + $0xd] sm:$0xff]
          %v1399 = vstv %s1396
          %v1400 = vmul.f32 %v1399, %v1397
          %v1401 = vmul.f32 %v1399, %v1398
          %v1402 = vadd.f32 %v1394, %v1400
          %v1403 = vadd.f32 %v1395, %v1401
          %s1404 = sld [smem:[#allocation9 + $0x55]]
          %v1405 = vstv %s1404
          %v1406 = vmul.f32 %v1405, %v1397
          %v1407 = vmul.f32 %v1405, %v1398
          %1410 = vrot.lane.b32.xlu0 %v1406, 127
          %v1411 = vpop.permute.xlu0 %1410
          %1412 = vrot.lane.b32.xlu0 %v1407, 127
          %v1413 = vpop.permute.xlu0 %1412
          %v1416 = vadd.f32 %v1402, %v1411
          %v1417 = vadd.f32 %v1403, %v1413
          %s1418 = sld [smem:[#allocation9 + $0x56]]
          %v1419 = vstv %s1418
          %v1420 = vmul.f32 %v1419, %v1397
          %v1421 = vmul.f32 %v1419, %v1398
          %1424 = vrot.lane.b32.xlu0 %v1420, 126
          %v1425 = vpop.permute.xlu0 %1424
          %1426 = vrot.lane.b32.xlu0 %v1421, 126
          %v1427 = vpop.permute.xlu0 %1426
          %v1430 = vadd.f32 %v1416, %v1425
          %v1431 = vadd.f32 %v1417, %v1427
          %s1432 = sld [smem:[#allocation9 + $0x57]]
          %v1433 = vstv %s1432
          %v1434 = vmul.f32 %v1433, %v1397
          %v1435 = vmul.f32 %v1433, %v1398
          %1438 = vrot.lane.b32.xlu0 %v1434, 125
          %v1439 = vpop.permute.xlu0 %1438
          %1440 = vrot.lane.b32.xlu0 %v1435, 125
          %v1441 = vpop.permute.xlu0 %1440
          %v1444 = vadd.f32 %v1430, %v1439
          %v1445 = vadd.f32 %v1431, %v1441
          %s1446 = sld [smem:[#allocation9 + $0x58]]
          %v1447 = vstv %s1446
          %v1448 = vmul.f32 %v1447, %v1397
          %v1449 = vmul.f32 %v1447, %v1398
          %1452 = vrot.lane.b32.xlu0 %v1448, 124
          %v1453 = vpop.permute.xlu0 %1452
          %1454 = vrot.lane.b32.xlu0 %v1449, 124
          %v1455 = vpop.permute.xlu0 %1454
          %v1458 = vadd.f32 %v1444, %v1453
          %v1459 = vadd.f32 %v1445, %v1455
          %s1460 = sld [smem:[#allocation9 + $0x59]]
          %v1461 = vstv %s1460
          %v1462 = vmul.f32 %v1461, %v1397
          %v1463 = vmul.f32 %v1461, %v1398
          %1466 = vrot.lane.b32.xlu0 %v1462, 123
          %v1467 = vpop.permute.xlu0 %1466
          %1468 = vrot.lane.b32.xlu0 %v1463, 123
          %v1469 = vpop.permute.xlu0 %1468
          %v1472 = vadd.f32 %v1458, %v1467
          %v1473 = vadd.f32 %v1459, %v1469
          %s1474 = sld [smem:[#allocation9 + $0x5a]]
          %v1475 = vstv %s1474
          %v1476 = vmul.f32 %v1475, %v1397
          %v1477 = vmul.f32 %v1475, %v1398
          %1480 = vrot.lane.b32.xlu0 %v1476, 122
          %v1481 = vpop.permute.xlu0 %1480
          %1482 = vrot.lane.b32.xlu0 %v1477, 122
          %v1483 = vpop.permute.xlu0 %1482
          %v1486 = vadd.f32 %v1472, %v1481
          %v1487 = vadd.f32 %v1473, %v1483
          %s1488 = sld [smem:[#allocation9 + $0x5b]]
          %v1489 = vld [vmem:[%s289 + $0x6] sm:$0xff]
          %v1490 = vld [vmem:[%s289 + $0xe] sm:$0xff]
          %v1491 = vstv %s1488
          %v1492 = vmul.f32 %v1491, %v1489
          %v1493 = vmul.f32 %v1491, %v1490
          %v1494 = vadd.f32 %v1486, %v1492
          %v1495 = vadd.f32 %v1487, %v1493
          %s1496 = sld [smem:[#allocation9 + $0x5c]]
          %v1497 = vstv %s1496
          %v1498 = vmul.f32 %v1497, %v1489
          %v1499 = vmul.f32 %v1497, %v1490
          %1502 = vrot.lane.b32.xlu0 %v1498, 127
          %v1503 = vpop.permute.xlu0 %1502
          %1504 = vrot.lane.b32.xlu0 %v1499, 127
          %v1505 = vpop.permute.xlu0 %1504
          %v1508 = vadd.f32 %v1494, %v1503
          %v1509 = vadd.f32 %v1495, %v1505
          %s1510 = sld [smem:[#allocation9 + $0x5d]]
          %v1511 = vstv %s1510
          %v1512 = vmul.f32 %v1511, %v1489
          %v1513 = vmul.f32 %v1511, %v1490
          %1516 = vrot.lane.b32.xlu0 %v1512, 126
          %v1517 = vpop.permute.xlu0 %1516
          %1518 = vrot.lane.b32.xlu0 %v1513, 126
          %v1519 = vpop.permute.xlu0 %1518
          %v1522 = vadd.f32 %v1508, %v1517
          %v1523 = vadd.f32 %v1509, %v1519
          %s1524 = sld [smem:[#allocation9 + $0x5e]]
          %v1525 = vstv %s1524
          %v1526 = vmul.f32 %v1525, %v1489
          %v1527 = vmul.f32 %v1525, %v1490
          %1530 = vrot.lane.b32.xlu0 %v1526, 125
          %v1531 = vpop.permute.xlu0 %1530
          %1532 = vrot.lane.b32.xlu0 %v1527, 125
          %v1533 = vpop.permute.xlu0 %1532
          %v1536 = vadd.f32 %v1522, %v1531
          %v1537 = vadd.f32 %v1523, %v1533
          %s1538 = sld [smem:[#allocation9 + $0x5f]]
          %v1539 = vstv %s1538
          %v1540 = vmul.f32 %v1539, %v1489
          %v1541 = vmul.f32 %v1539, %v1490
          %1544 = vrot.lane.b32.xlu0 %v1540, 124
          %v1545 = vpop.permute.xlu0 %1544
          %1546 = vrot.lane.b32.xlu0 %v1541, 124
          %v1547 = vpop.permute.xlu0 %1546
          %v1550 = vadd.f32 %v1536, %v1545
          %v1551 = vadd.f32 %v1537, %v1547
          %s1552 = sld [smem:[#allocation9 + $0x60]]
          %v1553 = vstv %s1552
          %v1554 = vmul.f32 %v1553, %v1489
          %v1555 = vmul.f32 %v1553, %v1490
          %1558 = vrot.lane.b32.xlu0 %v1554, 123
          %v1559 = vpop.permute.xlu0 %1558
          %1560 = vrot.lane.b32.xlu0 %v1555, 123
          %v1561 = vpop.permute.xlu0 %1560
          %v1564 = vadd.f32 %v1550, %v1559
          %v1565 = vadd.f32 %v1551, %v1561
          %s1566 = sld [smem:[#allocation9 + $0x61]]
          %v1567 = vstv %s1566
          %v1568 = vmul.f32 %v1567, %v1489
          %v1569 = vmul.f32 %v1567, %v1490
          %1572 = vrot.lane.b32.xlu0 %v1568, 122
          %v1573 = vpop.permute.xlu0 %1572
          %1574 = vrot.lane.b32.xlu0 %v1569, 122
          %v1575 = vpop.permute.xlu0 %1574
          %v1578 = vadd.f32 %v1564, %v1573
          %v1579 = vadd.f32 %v1565, %v1575
          %v1580 = vxor.u32 %v1578, 2147483648
          %v1581 = vxor.u32 %v1579, 2147483648
          %v1582 = vmul.f32 %v1580, 1.442695
          %v1583 = vpow.pop %v1582
          %v1584 = vmul.f32 %v1581, 1.442695
          %v1585 = vpow.pop %v1584
          %v1586 = vadd.f32 %v1583, 1.0
          %v1587 = vadd.f32 %v1585, 1.0
          %v1588 = vrcp.pop %v1586
          %v1589 = vmul.f32 1.0, %v1588
          %v1590 = vrcp.pop %v1587
          %v1591 = vmul.f32 1.0, %v1590
          %1592 = vst.msk [vmem:[%s192] sm:$0xff] %vm202, %v1589
          %1593 = vst.msk [vmem:[%s192 + $0x8] sm:$0xff] %vm202, %v1591
        $region48: #{tpu_custom_call.1} parent=27 // pred_fallthru
          _
        %s1594 = sand.u32 %s89, 1
        %s1595 = scalar_lea.sflag [#allocation7], %s1594
        %s1596 = sand.u32 %s89, 1
        %s1597 = smul.addr %s1596, 16
        %s1598 = scalar_lea.vmem [#allocation10], %s1597
        // Predicated region
        $region49: #{tpu_custom_call.1} parent=27 // pred_check
          %p1599 = pneg %p99
        $region50: #{tpu_custom_call.1} parent=27 // pred_check_branch
          %1601 = sbr.rel (%p1599) target = $region52
        $region51: #{tpu_custom_call.1} parent=27 // pred_region
          %s1603 = ssub.s32 256, 256
          %1604 = vsyncadd %s1595, %s1603
          %s1605 = smul.addr %s24, 2
          %s1606 = smul.addr %s1605, 128
          %s1607 = scalar_lea.hbm %s2, %s1606
          %s1608 = sshll.u32 %s1598, 4
          %s1609 = int_to_ptr.vmem [resolvable:$true] %s1608
          %1614 = dma.vmem_to_hbm [thread:$0]  %s1609, 256, %s1607, %s1595, 128, 128, 8
        $region52: #{tpu_custom_call.1} parent=27 // pred_fallthru
          _
      $region28: #{tpu_custom_call.1} parent=5 // pred_fallthru
        _
      %p1615 = scmp.le.s32.totalorder 2, %s15
      // Predicated region
      $region53: #{tpu_custom_call.1} parent=5 // pred_check
        %p1616 = pneg %p1615
      $region54: #{tpu_custom_call.1} parent=5 // pred_check_branch
        %1618 = sbr.rel (%p1616) target = $region56
      $region55: #{tpu_custom_call.1} parent=5 // pred_region
        %s1619 = ssub.s32 %s15, 2
        // Predicated region
        $region57: #{tpu_custom_call.1} parent=55 // pred_check
          %p1620 = pneg %p105
        $region58: #{tpu_custom_call.1} parent=55 // pred_check_branch
          %1622 = sbr.rel (%p1620) target = $region60
        $region59: #{tpu_custom_call.1} parent=55 // pred_region
          %s1623 = sand.u32 %s90, 1
          %s1624 = scalar_lea.sflag [#allocation7], %s1623
          %s1625 = sand.u32 %s90, 1
          %s1626 = smul.addr %s1625, 16
          %s1627 = scalar_lea.vmem [#allocation10], %s1626
          %1628 = dma.done %s1624, 256
        $region60: #{tpu_custom_call.1} parent=55 // pred_fallthru
          _
      $region56: #{tpu_custom_call.1} parent=5 // pred_fallthru
        _
    $region6: #{tpu_custom_call.1} parent=1 // loop_footer
      %s19 = sadd.s32 1, %s15
    $region7: #{tpu_custom_call.1} parent=1 // loop_footer_branch
      %14 = sbr.rel target = $region3
    $region8: #{tpu_custom_call.1} parent=1 // loop_exit
      _
    %1629 = vsyncpa [#allocation6], 1
    %s1630 = scalar_lea.sflag [#allocation6], 1
    %1631 = vsyncpa %s1630, 1
    %1632 = vsyncpa [#allocation7], 1
    %s1633 = scalar_lea.sflag [#allocation7], 1
    %1634 = vsyncpa %s1633, 1
    %1635 = vsyncpa [#allocation8], 1
    %s1636 = scalar_lea.sflag [#allocation8], 1
    %1637 = vsyncpa %s1636, 1

</llo_original>
